<compile_context>
chip_gen: v5e
topology: v5e:2x2
jax: 0.10.0
libtpu: 0.0.40
codegen_flags: <defaults>
</compile_context>

<pallas_src>
import functools

import jax
import jax.numpy as jnp
from jax import lax
from jax.experimental import pallas as pl
from jax.experimental.pallas import tpu as pltpu

# ---------------- config (small, deterministic) ----------------
VOCAB = 64
HIDDEN = 32
N_HEADS = 2
HEAD_DIM = HIDDEN // N_HEADS
INTER = 64
N_LAYERS = 2
N_CLASSES = 3
MAX_POS = 16
LN_EPS = 1e-12
LOGIT_PAD = 128           # lane-dense classifier output; sliced to N_CLASSES in JAX
INIT_STD = 0.05


# ---------------- shared helpers (used in-kernel and by the JAX reference) ----------------
def _layernorm(x, g, b):
    mean = jnp.mean(x, axis=-1, keepdims=True)
    xc = x - mean
    var = jnp.mean(xc * xc, axis=-1, keepdims=True)
    return xc * lax.rsqrt(var + LN_EPS) * g + b


def _gelu(x):
    # TODO(synk): HF BERT uses erf-based gelu; tanh approximation used here.
    return 0.5 * x * (1.0 + jnp.tanh(0.7978845608028654 * (x + 0.044715 * x * x * x)))


# ---------------- the single fused kernel ----------------
def _fused_bert_kernel(tok_ref, kmask_ref, emb_tab_ref, lw_ref, lb_ref,
                       hw_ref, hb_ref, o_ref, *, batch, seq):
    bs = batch * seq                 # number of tokens
    n = bs * N_HEADS                 # stacked (head, batch, seq) rows
    tab = VOCAB + MAX_POS

    # ---- embedding lookup: one-hot matmul against the fused table (word + pos+type0) ----
    tok = tok_ref[...]                                              # (bs, 2) int32
    col = lax.broadcasted_iota(jnp.int32, (bs, tab), 1)
    onehot = ((col == tok[:, 0:1]) | (col == tok[:, 1:2])).astype(jnp.float32)
    emb = jnp.dot(onehot, emb_tab_ref[...], preferred_element_type=jnp.float32)
    h = _layernorm(emb, hb_ref[0:1, :HIDDEN], hb_ref[1:2, :HIDDEN])  # (bs, HIDDEN)

    # ---- additive attention mask, built once and reused by every layer ----
    # Score rows/cols are ordered (head, batch, seq); same (head, batch) group
    # <=> r // seq == c // seq <=> (r ^ c) < seq  (seq is a power of two).
    km = kmask_ref[...].astype(jnp.float32)                          # (1, bs), 1 = keep
    key_add = jnp.tile((km - 1.0) * 1e9, (1, N_HEADS))               # (1, n) key-padding mask
    r_iota = lax.broadcasted_iota(jnp.int32, (n, n), 0)
    c_iota = lax.broadcasted_iota(jnp.int32, (n, n), 1)
    same_group = (r_iota ^ c_iota) < seq
    mask_nn = jnp.where(same_group, 0.0, -1e9) + key_add             # (n, n)

    for li in range(N_LAYERS):                                       # static unroll, all in VMEM
        w = lw_ref[li]                                               # (2*HIDDEN+INTER, 3*HIDDEN)
        b = lb_ref[li]                                               # (8, 3*HIDDEN)
        wqkv = w[0:HIDDEN, :]
        wo = w[HIDDEN:2 * HIDDEN, 0:HIDDEN]
        w1 = w[HIDDEN:2 * HIDDEN, HIDDEN:HIDDEN + INTER]
        w2 = w[2 * HIDDEN:2 * HIDDEN + INTER, 0:HIDDEN]

        # fused QKV projection (attention scale folded into the Q slice at pack time)
        qkv = jnp.dot(h, wqkv, preferred_element_type=jnp.float32) + b[0:1, :]

        def stack_heads(base):
            return jnp.concatenate(
                [qkv[:, base + hd * HEAD_DIM: base + (hd + 1) * HEAD_DIM]
                 for hd in range(N_HEADS)], axis=0)                  # (n, HEAD_DIM)

        q = stack_heads(0)
        k = stack_heads(HIDDEN)
        v = stack_heads(2 * HIDDEN)

        # one masked matmul pair + one softmax for every (batch, head) at once
        s = lax.dot_general(q, k, (((1,), (1,)), ((), ())),
                            preferred_element_type=jnp.float32) + mask_nn
        s = s - jnp.max(s, axis=-1, keepdims=True)
        p = jnp.exp(s)
        p = p * pl.reciprocal(jnp.sum(p, axis=-1, keepdims=True), approx=True)
        ctx = jnp.dot(p, v, preferred_element_type=jnp.float32)      # (n, HEAD_DIM)

        # head merge folded into the output projection: sum of sublane-aligned blocks
        attn = b[1:2, 0:HIDDEN]                                      # bo
        for hd in range(N_HEADS):
            attn = attn + jnp.dot(ctx[hd * bs:(hd + 1) * bs, :],
                                  wo[hd * HEAD_DIM:(hd + 1) * HEAD_DIM, :],
                                  preferred_element_type=jnp.float32)
        h = _layernorm(attn + h, b[2:3, 0:HIDDEN], b[3:4, 0:HIDDEN])

        ff = _gelu(jnp.dot(h, w1, preferred_element_type=jnp.float32) + b[4:5, 0:INTER])
        ff = jnp.dot(ff, w2, preferred_element_type=jnp.float32) + b[5:6, 0:HIDDEN]
        h = _layernorm(ff + h, b[6:7, 0:HIDDEN], b[7:8, 0:HIDDEN])

    # ---- pooler (dense + tanh) and classifier on every token row; the wrapper picks
    #      the CLS rows with a free strided slice.  Store is lane-dense (bs, 128). ----
    pooled = jnp.tanh(jnp.dot(h, hw_ref[0:HIDDEN, 0:HIDDEN],
                              preferred_element_type=jnp.float32) + hb_ref[2:3, 0:HIDDEN])
    o_ref[...] = (jnp.dot(pooled, hw_ref[HIDDEN:2 * HIDDEN, :],
                          preferred_element_type=jnp.float32) + hb_ref[3:4, :])


# ---------------- deterministic synthetic parameters ----------------
def init_params(key):
    keys = iter(jax.random.split(key, 64))

    def nrm(shape, std=INIT_STD):
        return std * jax.random.normal(next(keys), shape, jnp.float32)

    params = {
        "word_emb": nrm((VOCAB, HIDDEN)),
        "pos_emb": nrm((MAX_POS, HIDDEN)),
        "type_emb": nrm((2, HIDDEN)),
        "emb_ln_g": 1.0 + nrm((HIDDEN,)), "emb_ln_b": nrm((HIDDEN,)),
        "pool_w": nrm((HIDDEN, HIDDEN)), "pool_b": nrm((HIDDEN,)),
        "out_w": nrm((HIDDEN, N_CLASSES)), "out_b": nrm((N_CLASSES,)),
        "layers": [],
    }
    for _ in range(N_LAYERS):
        params["layers"].append({
            "wq": nrm((HIDDEN, HIDDEN)), "bq": nrm((HIDDEN,)),
            "wk": nrm((HIDDEN, HIDDEN)), "bk": nrm((HIDDEN,)),
            "wv": nrm((HIDDEN, HIDDEN)), "bv": nrm((HIDDEN,)),
            "wo": nrm((HIDDEN, HIDDEN)), "bo": nrm((HIDDEN,)),
            "ln1_g": 1.0 + nrm((HIDDEN,)), "ln1_b": nrm((HIDDEN,)),
            "w1": nrm((HIDDEN, INTER)), "b1": nrm((INTER,)),
            "w2": nrm((INTER, HIDDEN)), "b2": nrm((HIDDEN,)),
            "ln2_g": 1.0 + nrm((HIDDEN,)), "ln2_b": nrm((HIDDEN,)),
        })
    return params


def pack_params(params):
    """Pack all weights into a few contiguous slabs (fewer DMAs / VMEM buffers) and fold
    what can be folded at pack time: attention scale into the Q slice, token-type-0
    embedding into the position rows, classifier padded to a lane-dense 128 columns."""
    f32 = jnp.float32
    scale = 1.0 / (HEAD_DIM ** 0.5)
    W3 = 3 * HIDDEN

    def row(v, width):
        return jnp.zeros((1, width), f32).at[0, :v.shape[0]].set(v)

    emb_table = jnp.concatenate(
        [params["word_emb"],
         params["pos_emb"] + params["type_emb"][0][None, :]], axis=0)          # (VOCAB+MAX_POS, H)

    layer_w, layer_b = [], []
    for l in params["layers"]:
        wqkv = jnp.concatenate([scale * l["wq"], l["wk"], l["wv"]], axis=1)     # (H, 3H)
        mid = jnp.concatenate([l["wo"], l["w1"]], axis=1)                       # (H, 3H)
        bot = jnp.concatenate([l["w2"], jnp.zeros((INTER, W3 - HIDDEN), f32)], axis=1)  # (INTER, 3H)
        layer_w.append(jnp.concatenate([wqkv, mid, bot], axis=0))               # (2H+INTER, 3H)
        layer_b.append(jnp.concatenate([
            row(jnp.concatenate([scale * l["bq"], l["bk"], l["bv"]]), W3),      # 0: bqkv
            row(l["bo"], W3), row(l["ln1_g"], W3), row(l["ln1_b"], W3),         # 1,2,3
            row(l["b1"], W3), row(l["b2"], W3),                                 # 4,5
            row(l["ln2_g"], W3), row(l["ln2_b"], W3)], axis=0))                 # 6,7

    head_w = jnp.zeros((2 * HIDDEN, LOGIT_PAD), f32)
    head_w = head_w.at[:HIDDEN, :HIDDEN].set(params["pool_w"])
    head_w = head_w.at[HIDDEN:, :N_CLASSES].set(params["out_w"])

    head_b = jnp.concatenate([
        row(params["emb_ln_g"], LOGIT_PAD), row(params["emb_ln_b"], LOGIT_PAD),
        row(params["pool_b"], LOGIT_PAD), row(params["out_b"], LOGIT_PAD)], axis=0)  # (4, 128)

    return {"emb_table": emb_table,
            "layer_w": jnp.stack(layer_w),      # (L, 2H+INTER, 3H)
            "layer_b": jnp.stack(layer_b),      # (L, 8, 3H)
            "head_w": head_w,                   # (2H, 128)
            "head_b": head_b}                   # (4, 128)


# ---------------- forward pass (== SentimentClassifier_BERT.forward) ----------------
@jax.jit
def bert_classifier_forward(packed, input_ids, attention_mask):
    B, S = input_ids.shape
    assert S <= MAX_POS and (S & (S - 1)) == 0, "seq must be a power of two and <= MAX_POS"
    assert (N_HEADS & (N_HEADS - 1)) == 0
    bs = B * S

    # int-only glue: token ids + vocab-offset position ids, and the raw key mask.
    pos = jnp.tile(jnp.arange(S, dtype=jnp.int32), B)               # constant-folded
    tok_ids = jnp.stack([input_ids.reshape(bs).astype(jnp.int32), VOCAB + pos], axis=1)
    key_mask = attention_mask.reshape(1, bs).astype(jnp.int32)

    kernel = functools.partial(_fused_bert_kernel, batch=B, seq=S)
    logits_all = pl.pallas_call(
        kernel,
        out_shape=jax.ShapeDtypeStruct((bs, LOGIT_PAD), jnp.float32),
        compiler_params=pltpu.CompilerParams(vmem_limit_bytes=32 * 1024 * 1024),
    )(tok_ids, key_mask, packed["emb_table"], packed["layer_w"], packed["layer_b"],
      packed["head_w"], packed["head_b"])

    # CLS rows (token 0 of each sequence) + un-pad the lane-dense classifier output.
    return logits_all[::S, :N_CLASSES]


# ---------------- pure-JAX reference (for a correctness check) ----------------
def _reference_forward(params, input_ids, attention_mask):
    B, S = input_ids.shape
    hp = "highest"
    x = (params["word_emb"][input_ids]
         + params["pos_emb"][:S][None, :, :]
         + params["type_emb"][0][None, None, :])
    x = _layernorm(x, params["emb_ln_g"], params["emb_ln_b"])
    add_mask = ((1.0 - attention_mask.astype(jnp.float32)) * -1e9)[:, None, None, :]
    scale = 1.0 / (HEAD_DIM ** 0.5)
    for l in params["layers"]:
        def proj(w, b):
            return jnp.einsum("bsh,hk->bsk", x, w, precision=hp) + b

        def split(t):
            return t.reshape(B, S, N_HEADS, HEAD_DIM).transpose(0, 2, 1, 3)

        q, k, v = split(proj(l["wq"], l["bq"])), split(proj(l["wk"], l["bk"])), split(proj(l["wv"], l["bv"]))
        s = jnp.einsum("bhqd,bhkd->bhqk", q, k, precision=hp) * scale + add_mask
        p = jax.nn.softmax(s, axis=-1)
        ctx = jnp.einsum("bhqk,bhkd->bhqd", p, v, precision=hp)
        ctx = ctx.transpose(0, 2, 1, 3).reshape(B, S, HIDDEN)
        x = _layernorm(jnp.einsum("bsh,hk->bsk", ctx, l["wo"], precision=hp) + l["bo"] + x,
                       l["ln1_g"], l["ln1_b"])
        ff = _gelu(jnp.einsum("bsh,hk->bsk", x, l["w1"], precision=hp) + l["b1"])
        ff = jnp.einsum("bsk,kh->bsh", ff, l["w2"], precision=hp) + l["b2"]
        x = _layernorm(ff + x, l["ln2_g"], l["ln2_b"])
    pooled = jnp.tanh(jnp.einsum("bh,hk->bk", x[:, 0, :], params["pool_w"], precision=hp)
                      + params["pool_b"])
    return jnp.einsum("bh,hc->bc", pooled, params["out_w"], precision=hp) + params["out_b"]


if __name__ == "__main__":
    key = jax.random.PRNGKey(0)
    pkey, ikey = jax.random.split(key)
    params = init_params(pkey)
    packed = pack_params(params)

    B, S = 2, 8
    input_ids = jax.random.randint(ikey, (B, S), 0, VOCAB, dtype=jnp.int32)
    attention_mask = jnp.ones((B, S), jnp.int32).at[1, 6:].set(0)

    logits = bert_classifier_forward(packed, input_ids, attention_mask)
    jax.block_until_ready(logits)
    assert logits.shape == (B, N_CLASSES) and logits.dtype == jnp.float32

    # Pure-JAX reference check (tolerance covers the approx softmax reciprocal and any
    # matmul-pass precision difference between Mosaic and XLA; logits are ~0.1 scale).
    ref = _reference_forward(params, input_ids, attention_mask)
    err = float(jnp.max(jnp.abs(logits - ref)))
    assert err < 1e-2, f"kernel/reference mismatch: max abs diff = {err}"
    print("KERNEL_OK")
</pallas_src>

<mosaic_0001>
module attributes {stable_mosaic.version = 11 : i64} {
  func.func @_fused_bert_kernel(%arg0: memref<16x2xi32, #tpu.memory_space<vmem>>, %arg1: memref<1x16xi32, #tpu.memory_space<vmem>>, %arg2: memref<80x32xf32, #tpu.memory_space<vmem>>, %arg3: memref<2x128x96xf32, #tpu.memory_space<vmem>>, %arg4: memref<2x8x96xf32, #tpu.memory_space<vmem>>, %arg5: memref<64x128xf32, #tpu.memory_space<vmem>>, %arg6: memref<4x128xf32, #tpu.memory_space<vmem>>, %arg7: memref<16x128xf32, #tpu.memory_space<vmem>>) attributes {dimension_semantics = [], scalar_prefetch = 0 : i64, scratch_operands = 0 : i64, tpu.core_type = #tpu.core_type<tc>} {
    %c0 = arith.constant 0 : index
    %c0_0 = arith.constant 0 : index
    %0 = vector.load %arg0[%c0, %c0_0] : memref<16x2xi32, #tpu.memory_space<vmem>>, vector<16x2xi32>
    %1 = tpu.iota {dimensions = array<i32: 1>} : vector<16x80xi32>
    %2 = vector.extract_strided_slice %0 {offsets = [0, 0], sizes = [16, 1], strides = [1, 1]} : vector<16x2xi32> to vector<16x1xi32>
    %3 = vector.broadcast %2 : vector<16x1xi32> to vector<16x80xi32>
    %4 = arith.cmpi eq, %1, %3 : vector<16x80xi32>
    %5 = vector.extract_strided_slice %0 {offsets = [0, 1], sizes = [16, 1], strides = [1, 1]} : vector<16x2xi32> to vector<16x1xi32>
    %6 = vector.broadcast %5 : vector<16x1xi32> to vector<16x80xi32>
    %7 = arith.cmpi eq, %1, %6 : vector<16x80xi32>
    %8 = arith.ori %4, %7 : vector<16x80xi1>
    %9 = arith.extui %8 : vector<16x80xi1> to vector<16x80xi32>
    %10 = arith.sitofp %9 : vector<16x80xi32> to vector<16x80xf32>
    %c0_1 = arith.constant 0 : index
    %c0_2 = arith.constant 0 : index
    %11 = vector.load %arg2[%c0_1, %c0_2] : memref<80x32xf32, #tpu.memory_space<vmem>>, vector<80x32xf32>
    %cst = arith.constant dense<0.000000e+00> : vector<16x32xf32>
    %12 = tpu.matmul %10, %11, %cst {dimension_numbers = #tpu.dot_dimension_numbers<[1], [0], [0], [1], [0, 0, 1, 1], [], []>} : vector<16x80xf32>, vector<80x32xf32>, vector<16x32xf32> -> vector<16x32xf32>
    %c0_3 = arith.constant 0 : index
    %c0_4 = arith.constant 0 : index
    %13 = vector.load %arg6[%c0_3, %c0_4] : memref<4x128xf32, #tpu.memory_space<vmem>>, vector<1x32xf32>
    %c1 = arith.constant 1 : index
    %c0_5 = arith.constant 0 : index
    %14 = vector.load %arg6[%c1, %c0_5] : memref<4x128xf32, #tpu.memory_space<vmem>>, vector<1x32xf32>
    %cst_6 = arith.constant dense<0.000000e+00> : vector<16xf32>
    %15 = vector.multi_reduction <add>, %12, %cst_6 [1] : vector<16x32xf32> to vector<16xf32>
    %16 = vector.shape_cast %15 : vector<16xf32> to vector<16x1xf32>
    %cst_7 = arith.constant 3.200000e+01 : f32
    %17 = vector.broadcast %cst_7 : f32 to vector<16x1xf32>
    %18 = arith.divf %16, %17 : vector<16x1xf32>
    %19 = vector.broadcast %18 : vector<16x1xf32> to vector<16x32xf32>
    %20 = arith.subf %12, %19 : vector<16x32xf32>
    %21 = arith.mulf %20, %20 : vector<16x32xf32>
    %cst_8 = arith.constant dense<0.000000e+00> : vector<16xf32>
    %22 = vector.multi_reduction <add>, %21, %cst_8 [1] : vector<16x32xf32> to vector<16xf32>
    %23 = vector.shape_cast %22 : vector<16xf32> to vector<16x1xf32>
    %cst_9 = arith.constant 3.200000e+01 : f32
    %24 = vector.broadcast %cst_9 : f32 to vector<16x1xf32>
    %25 = arith.divf %23, %24 : vector<16x1xf32>
    %cst_10 = arith.constant 9.99999996E-13 : f32
    %26 = vector.broadcast %cst_10 : f32 to vector<16x1xf32>
    %27 = arith.addf %25, %26 : vector<16x1xf32>
    %28 = math.rsqrt %27 : vector<16x1xf32>
    %29 = vector.broadcast %28 : vector<16x1xf32> to vector<16x32xf32>
    %30 = arith.mulf %20, %29 : vector<16x32xf32>
    %31 = vector.broadcast %13 : vector<1x32xf32> to vector<16x32xf32>
    %32 = arith.mulf %30, %31 : vector<16x32xf32>
    %33 = vector.broadcast %14 : vector<1x32xf32> to vector<16x32xf32>
    %34 = arith.addf %32, %33 : vector<16x32xf32>
    %c0_11 = arith.constant 0 : index
    %c0_12 = arith.constant 0 : index
    %35 = vector.load %arg1[%c0_11, %c0_12] : memref<1x16xi32, #tpu.memory_space<vmem>>, vector<1x16xi32>
    %36 = arith.sitofp %35 : vector<1x16xi32> to vector<1x16xf32>
    %cst_13 = arith.constant 1.000000e+00 : f32
    %37 = vector.broadcast %cst_13 : f32 to vector<1x16xf32>
    %38 = arith.subf %36, %37 : vector<1x16xf32>
    %cst_14 = arith.constant 1.000000e+09 : f32
    %39 = vector.broadcast %cst_14 : f32 to vector<1x16xf32>
    %40 = arith.mulf %38, %39 : vector<1x16xf32>
    %41 = tpu.concatenate %40, %40 in 1 : vector<1x16xf32>, vector<1x16xf32> -> vector<1x32xf32>
    %42 = tpu.iota {dimensions = array<i32: 0>} : vector<32x32xi32>
    %43 = tpu.iota {dimensions = array<i32: 1>} : vector<32x32xi32>
    %44 = arith.xori %42, %43 : vector<32x32xi32>
    %c8_i32 = arith.constant 8 : i32
    %45 = vector.broadcast %c8_i32 : i32 to vector<32x32xi32>
    %46 = arith.cmpi slt, %44, %45 : vector<32x32xi32>
    %cst_15 = arith.constant 0.000000e+00 : f32
    %cst_16 = arith.constant -1.000000e+09 : f32
    %47 = vector.broadcast %cst_15 : f32 to vector<32x32xf32>
    %48 = vector.broadcast %cst_16 : f32 to vector<32x32xf32>
    %49 = arith.select %46, %47, %48 : vector<32x32xi1>, vector<32x32xf32>
    %50 = vector.broadcast %41 : vector<1x32xf32> to vector<32x32xf32>
    %51 = arith.addf %49, %50 : vector<32x32xf32>
    %c0_17 = arith.constant 0 : index
    %c0_18 = arith.constant 0 : index
    %c0_19 = arith.constant 0 : index
    %52 = vector.load %arg3[%c0_17, %c0_18, %c0_19] : memref<2x128x96xf32, #tpu.memory_space<vmem>>, vector<1x128x96xf32>
    %53 = vector.shape_cast %52 : vector<1x128x96xf32> to vector<128x96xf32>
    %c0_20 = arith.constant 0 : index
    %c0_21 = arith.constant 0 : index
    %c0_22 = arith.constant 0 : index
    %54 = vector.load %arg4[%c0_20, %c0_21, %c0_22] : memref<2x8x96xf32, #tpu.memory_space<vmem>>, vector<1x8x96xf32>
    %55 = vector.shape_cast %54 : vector<1x8x96xf32> to vector<8x96xf32>
    %56 = vector.extract_strided_slice %53 {offsets = [0, 0], sizes = [32, 96], strides = [1, 1]} : vector<128x96xf32> to vector<32x96xf32>
    %57 = vector.extract_strided_slice %53 {offsets = [32, 0], sizes = [32, 32], strides = [1, 1]} : vector<128x96xf32> to vector<32x32xf32>
    %58 = vector.extract_strided_slice %53 {offsets = [32, 32], sizes = [32, 64], strides = [1, 1]} : vector<128x96xf32> to vector<32x64xf32>
    %59 = vector.extract_strided_slice %53 {offsets = [64, 0], sizes = [64, 32], strides = [1, 1]} : vector<128x96xf32> to vector<64x32xf32>
    %cst_23 = arith.constant dense<0.000000e+00> : vector<16x96xf32>
    %60 = tpu.matmul %34, %56, %cst_23 {dimension_numbers = #tpu.dot_dimension_numbers<[1], [0], [0], [1], [0, 0, 1, 1], [], []>} : vector<16x32xf32>, vector<32x96xf32>, vector<16x96xf32> -> vector<16x96xf32>
    %61 = vector.extract_strided_slice %55 {offsets = [0, 0], sizes = [1, 96], strides = [1, 1]} : vector<8x96xf32> to vector<1x96xf32>
    %62 = vector.broadcast %61 : vector<1x96xf32> to vector<16x96xf32>
    %63 = arith.addf %60, %62 : vector<16x96xf32>
    %64 = vector.extract_strided_slice %63 {offsets = [0, 0], sizes = [16, 16], strides = [1, 1]} : vector<16x96xf32> to vector<16x16xf32>
    %65 = vector.extract_strided_slice %63 {offsets = [0, 16], sizes = [16, 16], strides = [1, 1]} : vector<16x96xf32> to vector<16x16xf32>
    %66 = tpu.concatenate %64, %65 in 0 : vector<16x16xf32>, vector<16x16xf32> -> vector<32x16xf32>
    %67 = vector.extract_strided_slice %63 {offsets = [0, 32], sizes = [16, 16], strides = [1, 1]} : vector<16x96xf32> to vector<16x16xf32>
    %68 = vector.extract_strided_slice %63 {offsets = [0, 48], sizes = [16, 16], strides = [1, 1]} : vector<16x96xf32> to vector<16x16xf32>
    %69 = tpu.concatenate %67, %68 in 0 : vector<16x16xf32>, vector<16x16xf32> -> vector<32x16xf32>
    %70 = vector.extract_strided_slice %63 {offsets = [0, 64], sizes = [16, 16], strides = [1, 1]} : vector<16x96xf32> to vector<16x16xf32>
    %71 = vector.extract_strided_slice %63 {offsets = [0, 80], sizes = [16, 16], strides = [1, 1]} : vector<16x96xf32> to vector<16x16xf32>
    %72 = tpu.concatenate %70, %71 in 0 : vector<16x16xf32>, vector<16x16xf32> -> vector<32x16xf32>
    %cst_24 = arith.constant dense<0.000000e+00> : vector<32x32xf32>
    %73 = tpu.matmul %66, %69, %cst_24 {dimension_numbers = #tpu.dot_dimension_numbers<[1], [1], [0], [0], [0, 0, 1, 0], [], []>} : vector<32x16xf32>, vector<32x16xf32>, vector<32x32xf32> -> vector<32x32xf32>
    %74 = arith.addf %73, %51 : vector<32x32xf32>
    %cst_25 = arith.constant dense<0xFF800000> : vector<32xf32>
    %75 = vector.multi_reduction <maximumf>, %74, %cst_25 [1] : vector<32x32xf32> to vector<32xf32>
    %76 = vector.shape_cast %75 : vector<32xf32> to vector<32x1xf32>
    %77 = vector.broadcast %76 : vector<32x1xf32> to vector<32x32xf32>
    %78 = arith.subf %74, %77 : vector<32x32xf32>
    %79 = math.exp %78 : vector<32x32xf32>
    %cst_26 = arith.constant dense<0.000000e+00> : vector<32xf32>
    %80 = vector.multi_reduction <add>, %79, %cst_26 [1] : vector<32x32xf32> to vector<32xf32>
    %81 = vector.shape_cast %80 : vector<32xf32> to vector<32x1xf32>
    %82 = tpu.reciprocal %81 {approx = true} : vector<32x1xf32> -> vector<32x1xf32>
    %83 = vector.broadcast %82 : vector<32x1xf32> to vector<32x32xf32>
    %84 = arith.mulf %79, %83 : vector<32x32xf32>
    %cst_27 = arith.constant dense<0.000000e+00> : vector<32x16xf32>
    %85 = tpu.matmul %84, %72, %cst_27 {dimension_numbers = #tpu.dot_dimension_numbers<[1], [0], [0], [1], [0, 0, 1, 1], [], []>} : vector<32x32xf32>, vector<32x16xf32>, vector<32x16xf32> -> vector<32x16xf32>
    %86 = vector.extract_strided_slice %55 {offsets = [1, 0], sizes = [1, 32], strides = [1, 1]} : vector<8x96xf32> to vector<1x32xf32>
    %87 = vector.extract_strided_slice %85 {offsets = [0, 0], sizes = [16, 16], strides = [1, 1]} : vector<32x16xf32> to vector<16x16xf32>
    %88 = vector.extract_strided_slice %57 {offsets = [0, 0], sizes = [16, 32], strides = [1, 1]} : vector<32x32xf32> to vector<16x32xf32>
    %cst_28 = arith.constant dense<0.000000e+00> : vector<16x32xf32>
    %89 = tpu.matmul %87, %88, %cst_28 {dimension_numbers = #tpu.dot_dimension_numbers<[1], [0], [0], [1], [0, 0, 1, 1], [], []>} : vector<16x16xf32>, vector<16x32xf32>, vector<16x32xf32> -> vector<16x32xf32>
    %90 = vector.broadcast %86 : vector<1x32xf32> to vector<16x32xf32>
    %91 = arith.addf %90, %89 : vector<16x32xf32>
    %92 = vector.extract_strided_slice %85 {offsets = [16, 0], sizes = [16, 16], strides = [1, 1]} : vector<32x16xf32> to vector<16x16xf32>
    %93 = vector.extract_strided_slice %57 {offsets = [16, 0], sizes = [16, 32], strides = [1, 1]} : vector<32x32xf32> to vector<16x32xf32>
    %cst_29 = arith.constant dense<0.000000e+00> : vector<16x32xf32>
    %94 = tpu.matmul %92, %93, %cst_29 {dimension_numbers = #tpu.dot_dimension_numbers<[1], [0], [0], [1], [0, 0, 1, 1], [], []>} : vector<16x16xf32>, vector<16x32xf32>, vector<16x32xf32> -> vector<16x32xf32>
    %95 = arith.addf %91, %94 : vector<16x32xf32>
    %96 = arith.addf %95, %34 : vector<16x32xf32>
    %97 = vector.extract_strided_slice %55 {offsets = [2, 0], sizes = [1, 32], strides = [1, 1]} : vector<8x96xf32> to vector<1x32xf32>
    %98 = vector.extract_strided_slice %55 {offsets = [3, 0], sizes = [1, 32], strides = [1, 1]} : vector<8x96xf32> to vector<1x32xf32>
    %cst_30 = arith.constant dense<0.000000e+00> : vector<16xf32>
    %99 = vector.multi_reduction <add>, %96, %cst_30 [1] : vector<16x32xf32> to vector<16xf32>
    %100 = vector.shape_cast %99 : vector<16xf32> to vector<16x1xf32>
    %cst_31 = arith.constant 3.200000e+01 : f32
    %101 = vector.broadcast %cst_31 : f32 to vector<16x1xf32>
    %102 = arith.divf %100, %101 : vector<16x1xf32>
    %103 = vector.broadcast %102 : vector<16x1xf32> to vector<16x32xf32>
    %104 = arith.subf %96, %103 : vector<16x32xf32>
    %105 = arith.mulf %104, %104 : vector<16x32xf32>
    %cst_32 = arith.constant dense<0.000000e+00> : vector<16xf32>
    %106 = vector.multi_reduction <add>, %105, %cst_32 [1] : vector<16x32xf32> to vector<16xf32>
    %107 = vector.shape_cast %106 : vector<16xf32> to vector<16x1xf32>
    %cst_33 = arith.constant 3.200000e+01 : f32
    %108 = vector.broadcast %cst_33 : f32 to vector<16x1xf32>
    %109 = arith.divf %107, %108 : vector<16x1xf32>
    %cst_34 = arith.constant 9.99999996E-13 : f32
    %110 = vector.broadcast %cst_34 : f32 to vector<16x1xf32>
    %111 = arith.addf %109, %110 : vector<16x1xf32>
    %112 = math.rsqrt %111 : vector<16x1xf32>
    %113 = vector.broadcast %112 : vector<16x1xf32> to vector<16x32xf32>
    %114 = arith.mulf %104, %113 : vector<16x32xf32>
    %115 = vector.broadcast %97 : vector<1x32xf32> to vector<16x32xf32>
    %116 = arith.mulf %114, %115 : vector<16x32xf32>
    %117 = vector.broadcast %98 : vector<1x32xf32> to vector<16x32xf32>
    %118 = arith.addf %116, %117 : vector<16x32xf32>
    %cst_35 = arith.constant dense<0.000000e+00> : vector<16x64xf32>
    %119 = tpu.matmul %118, %58, %cst_35 {dimension_numbers = #tpu.dot_dimension_numbers<[1], [0], [0], [1], [0, 0, 1, 1], [], []>} : vector<16x32xf32>, vector<32x64xf32>, vector<16x64xf32> -> vector<16x64xf32>
    %120 = vector.extract_strided_slice %55 {offsets = [4, 0], sizes = [1, 64], strides = [1, 1]} : vector<8x96xf32> to vector<1x64xf32>
    %121 = vector.broadcast %120 : vector<1x64xf32> to vector<16x64xf32>
    %122 = arith.addf %119, %121 : vector<16x64xf32>
    %cst_36 = arith.constant 5.000000e-01 : f32
    %123 = vector.broadcast %cst_36 : f32 to vector<16x64xf32>
    %124 = arith.mulf %123, %122 : vector<16x64xf32>
    %cst_37 = arith.constant 4.471500e-02 : f32
    %125 = vector.broadcast %cst_37 : f32 to vector<16x64xf32>
    %126 = arith.mulf %125, %122 : vector<16x64xf32>
    %127 = arith.mulf %126, %122 : vector<16x64xf32>
    %128 = arith.mulf %127, %122 : vector<16x64xf32>
    %129 = arith.addf %122, %128 : vector<16x64xf32>
    %cst_38 = arith.constant 0.797884583 : f32
    %130 = vector.broadcast %cst_38 : f32 to vector<16x64xf32>
    %131 = arith.mulf %130, %129 : vector<16x64xf32>
    %132 = math.tanh %131 : vector<16x64xf32>
    %cst_39 = arith.constant 1.000000e+00 : f32
    %133 = vector.broadcast %cst_39 : f32 to vector<16x64xf32>
    %134 = arith.addf %133, %132 : vector<16x64xf32>
    %135 = arith.mulf %124, %134 : vector<16x64xf32>
    %cst_40 = arith.constant dense<0.000000e+00> : vector<16x32xf32>
    %136 = tpu.matmul %135, %59, %cst_40 {dimension_numbers = #tpu.dot_dimension_numbers<[1], [0], [0], [1], [0, 0, 1, 1], [], []>} : vector<16x64xf32>, vector<64x32xf32>, vector<16x32xf32> -> vector<16x32xf32>
    %137 = vector.extract_strided_slice %55 {offsets = [5, 0], sizes = [1, 32], strides = [1, 1]} : vector<8x96xf32> to vector<1x32xf32>
    %138 = vector.broadcast %137 : vector<1x32xf32> to vector<16x32xf32>
    %139 = arith.addf %136, %138 : vector<16x32xf32>
    %140 = arith.addf %139, %118 : vector<16x32xf32>
    %141 = vector.extract_strided_slice %55 {offsets = [6, 0], sizes = [1, 32], strides = [1, 1]} : vector<8x96xf32> to vector<1x32xf32>
    %142 = vector.extract_strided_slice %55 {offsets = [7, 0], sizes = [1, 32], strides = [1, 1]} : vector<8x96xf32> to vector<1x32xf32>
    %cst_41 = arith.constant dense<0.000000e+00> : vector<16xf32>
    %143 = vector.multi_reduction <add>, %140, %cst_41 [1] : vector<16x32xf32> to vector<16xf32>
    %144 = vector.shape_cast %143 : vector<16xf32> to vector<16x1xf32>
    %cst_42 = arith.constant 3.200000e+01 : f32
    %145 = vector.broadcast %cst_42 : f32 to vector<16x1xf32>
    %146 = arith.divf %144, %145 : vector<16x1xf32>
    %147 = vector.broadcast %146 : vector<16x1xf32> to vector<16x32xf32>
    %148 = arith.subf %140, %147 : vector<16x32xf32>
    %149 = arith.mulf %148, %148 : vector<16x32xf32>
    %cst_43 = arith.constant dense<0.000000e+00> : vector<16xf32>
    %150 = vector.multi_reduction <add>, %149, %cst_43 [1] : vector<16x32xf32> to vector<16xf32>
    %151 = vector.shape_cast %150 : vector<16xf32> to vector<16x1xf32>
    %cst_44 = arith.constant 3.200000e+01 : f32
    %152 = vector.broadcast %cst_44 : f32 to vector<16x1xf32>
    %153 = arith.divf %151, %152 : vector<16x1xf32>
    %cst_45 = arith.constant 9.99999996E-13 : f32
    %154 = vector.broadcast %cst_45 : f32 to vector<16x1xf32>
    %155 = arith.addf %153, %154 : vector<16x1xf32>
    %156 = math.rsqrt %155 : vector<16x1xf32>
    %157 = vector.broadcast %156 : vector<16x1xf32> to vector<16x32xf32>
    %158 = arith.mulf %148, %157 : vector<16x32xf32>
    %159 = vector.broadcast %141 : vector<1x32xf32> to vector<16x32xf32>
    %160 = arith.mulf %158, %159 : vector<16x32xf32>
    %161 = vector.broadcast %142 : vector<1x32xf32> to vector<16x32xf32>
    %162 = arith.addf %160, %161 : vector<16x32xf32>
    %c1_46 = arith.constant 1 : index
    %c0_47 = arith.constant 0 : index
    %c0_48 = arith.constant 0 : index
    %163 = vector.load %arg3[%c1_46, %c0_47, %c0_48] : memref<2x128x96xf32, #tpu.memory_space<vmem>>, vector<1x128x96xf32>
    %164 = vector.shape_cast %163 : vector<1x128x96xf32> to vector<128x96xf32>
    %c1_49 = arith.constant 1 : index
    %c0_50 = arith.constant 0 : index
    %c0_51 = arith.constant 0 : index
    %165 = vector.load %arg4[%c1_49, %c0_50, %c0_51] : memref<2x8x96xf32, #tpu.memory_space<vmem>>, vector<1x8x96xf32>
    %166 = vector.shape_cast %165 : vector<1x8x96xf32> to vector<8x96xf32>
    %167 = vector.extract_strided_slice %164 {offsets = [0, 0], sizes = [32, 96], strides = [1, 1]} : vector<128x96xf32> to vector<32x96xf32>
    %168 = vector.extract_strided_slice %164 {offsets = [32, 0], sizes = [32, 32], strides = [1, 1]} : vector<128x96xf32> to vector<32x32xf32>
    %169 = vector.extract_strided_slice %164 {offsets = [32, 32], sizes = [32, 64], strides = [1, 1]} : vector<128x96xf32> to vector<32x64xf32>
    %170 = vector.extract_strided_slice %164 {offsets = [64, 0], sizes = [64, 32], strides = [1, 1]} : vector<128x96xf32> to vector<64x32xf32>
    %cst_52 = arith.constant dense<0.000000e+00> : vector<16x96xf32>
    %171 = tpu.matmul %162, %167, %cst_52 {dimension_numbers = #tpu.dot_dimension_numbers<[1], [0], [0], [1], [0, 0, 1, 1], [], []>} : vector<16x32xf32>, vector<32x96xf32>, vector<16x96xf32> -> vector<16x96xf32>
    %172 = vector.extract_strided_slice %166 {offsets = [0, 0], sizes = [1, 96], strides = [1, 1]} : vector<8x96xf32> to vector<1x96xf32>
    %173 = vector.broadcast %172 : vector<1x96xf32> to vector<16x96xf32>
    %174 = arith.addf %171, %173 : vector<16x96xf32>
    %175 = vector.extract_strided_slice %174 {offsets = [0, 0], sizes = [16, 16], strides = [1, 1]} : vector<16x96xf32> to vector<16x16xf32>
    %176 = vector.extract_strided_slice %174 {offsets = [0, 16], sizes = [16, 16], strides = [1, 1]} : vector<16x96xf32> to vector<16x16xf32>
    %177 = tpu.concatenate %175, %176 in 0 : vector<16x16xf32>, vector<16x16xf32> -> vector<32x16xf32>
    %178 = vector.extract_strided_slice %174 {offsets = [0, 32], sizes = [16, 16], strides = [1, 1]} : vector<16x96xf32> to vector<16x16xf32>
    %179 = vector.extract_strided_slice %174 {offsets = [0, 48], sizes = [16, 16], strides = [1, 1]} : vector<16x96xf32> to vector<16x16xf32>
    %180 = tpu.concatenate %178, %179 in 0 : vector<16x16xf32>, vector<16x16xf32> -> vector<32x16xf32>
    %181 = vector.extract_strided_slice %174 {offsets = [0, 64], sizes = [16, 16], strides = [1, 1]} : vector<16x96xf32> to vector<16x16xf32>
    %182 = vector.extract_strided_slice %174 {offsets = [0, 80], sizes = [16, 16], strides = [1, 1]} : vector<16x96xf32> to vector<16x16xf32>
    %183 = tpu.concatenate %181, %182 in 0 : vector<16x16xf32>, vector<16x16xf32> -> vector<32x16xf32>
    %cst_53 = arith.constant dense<0.000000e+00> : vector<32x32xf32>
    %184 = tpu.matmul %177, %180, %cst_53 {dimension_numbers = #tpu.dot_dimension_numbers<[1], [1], [0], [0], [0, 0, 1, 0], [], []>} : vector<32x16xf32>, vector<32x16xf32>, vector<32x32xf32> -> vector<32x32xf32>
    %185 = arith.addf %184, %51 : vector<32x32xf32>
    %cst_54 = arith.constant dense<0xFF800000> : vector<32xf32>
    %186 = vector.multi_reduction <maximumf>, %185, %cst_54 [1] : vector<32x32xf32> to vector<32xf32>
    %187 = vector.shape_cast %186 : vector<32xf32> to vector<32x1xf32>
    %188 = vector.broadcast %187 : vector<32x1xf32> to vector<32x32xf32>
    %189 = arith.subf %185, %188 : vector<32x32xf32>
    %190 = math.exp %189 : vector<32x32xf32>
    %cst_55 = arith.constant dense<0.000000e+00> : vector<32xf32>
    %191 = vector.multi_reduction <add>, %190, %cst_55 [1] : vector<32x32xf32> to vector<32xf32>
    %192 = vector.shape_cast %191 : vector<32xf32> to vector<32x1xf32>
    %193 = tpu.reciprocal %192 {approx = true} : vector<32x1xf32> -> vector<32x1xf32>
    %194 = vector.broadcast %193 : vector<32x1xf32> to vector<32x32xf32>
    %195 = arith.mulf %190, %194 : vector<32x32xf32>
    %cst_56 = arith.constant dense<0.000000e+00> : vector<32x16xf32>
    %196 = tpu.matmul %195, %183, %cst_56 {dimension_numbers = #tpu.dot_dimension_numbers<[1], [0], [0], [1], [0, 0, 1, 1], [], []>} : vector<32x32xf32>, vector<32x16xf32>, vector<32x16xf32> -> vector<32x16xf32>
    %197 = vector.extract_strided_slice %166 {offsets = [1, 0], sizes = [1, 32], strides = [1, 1]} : vector<8x96xf32> to vector<1x32xf32>
    %198 = vector.extract_strided_slice %196 {offsets = [0, 0], sizes = [16, 16], strides = [1, 1]} : vector<32x16xf32> to vector<16x16xf32>
    %199 = vector.extract_strided_slice %168 {offsets = [0, 0], sizes = [16, 32], strides = [1, 1]} : vector<32x32xf32> to vector<16x32xf32>
    %cst_57 = arith.constant dense<0.000000e+00> : vector<16x32xf32>
    %200 = tpu.matmul %198, %199, %cst_57 {dimension_numbers = #tpu.dot_dimension_numbers<[1], [0], [0], [1], [0, 0, 1, 1], [], []>} : vector<16x16xf32>, vector<16x32xf32>, vector<16x32xf32> -> vector<16x32xf32>
    %201 = vector.broadcast %197 : vector<1x32xf32> to vector<16x32xf32>
    %202 = arith.addf %201, %200 : vector<16x32xf32>
    %203 = vector.extract_strided_slice %196 {offsets = [16, 0], sizes = [16, 16], strides = [1, 1]} : vector<32x16xf32> to vector<16x16xf32>
    %204 = vector.extract_strided_slice %168 {offsets = [16, 0], sizes = [16, 32], strides = [1, 1]} : vector<32x32xf32> to vector<16x32xf32>
    %cst_58 = arith.constant dense<0.000000e+00> : vector<16x32xf32>
    %205 = tpu.matmul %203, %204, %cst_58 {dimension_numbers = #tpu.dot_dimension_numbers<[1], [0], [0], [1], [0, 0, 1, 1], [], []>} : vector<16x16xf32>, vector<16x32xf32>, vector<16x32xf32> -> vector<16x32xf32>
    %206 = arith.addf %202, %205 : vector<16x32xf32>
    %207 = arith.addf %206, %162 : vector<16x32xf32>
    %208 = vector.extract_strided_slice %166 {offsets = [2, 0], sizes = [1, 32], strides = [1, 1]} : vector<8x96xf32> to vector<1x32xf32>
    %209 = vector.extract_strided_slice %166 {offsets = [3, 0], sizes = [1, 32], strides = [1, 1]} : vector<8x96xf32> to vector<1x32xf32>
    %cst_59 = arith.constant dense<0.000000e+00> : vector<16xf32>
    %210 = vector.multi_reduction <add>, %207, %cst_59 [1] : vector<16x32xf32> to vector<16xf32>
    %211 = vector.shape_cast %210 : vector<16xf32> to vector<16x1xf32>
    %cst_60 = arith.constant 3.200000e+01 : f32
    %212 = vector.broadcast %cst_60 : f32 to vector<16x1xf32>
    %213 = arith.divf %211, %212 : vector<16x1xf32>
    %214 = vector.broadcast %213 : vector<16x1xf32> to vector<16x32xf32>
    %215 = arith.subf %207, %214 : vector<16x32xf32>
    %216 = arith.mulf %215, %215 : vector<16x32xf32>
    %cst_61 = arith.constant dense<0.000000e+00> : vector<16xf32>
    %217 = vector.multi_reduction <add>, %216, %cst_61 [1] : vector<16x32xf32> to vector<16xf32>
    %218 = vector.shape_cast %217 : vector<16xf32> to vector<16x1xf32>
    %cst_62 = arith.constant 3.200000e+01 : f32
    %219 = vector.broadcast %cst_62 : f32 to vector<16x1xf32>
    %220 = arith.divf %218, %219 : vector<16x1xf32>
    %cst_63 = arith.constant 9.99999996E-13 : f32
    %221 = vector.broadcast %cst_63 : f32 to vector<16x1xf32>
    %222 = arith.addf %220, %221 : vector<16x1xf32>
    %223 = math.rsqrt %222 : vector<16x1xf32>
    %224 = vector.broadcast %223 : vector<16x1xf32> to vector<16x32xf32>
    %225 = arith.mulf %215, %224 : vector<16x32xf32>
    %226 = vector.broadcast %208 : vector<1x32xf32> to vector<16x32xf32>
    %227 = arith.mulf %225, %226 : vector<16x32xf32>
    %228 = vector.broadcast %209 : vector<1x32xf32> to vector<16x32xf32>
    %229 = arith.addf %227, %228 : vector<16x32xf32>
    %cst_64 = arith.constant dense<0.000000e+00> : vector<16x64xf32>
    %230 = tpu.matmul %229, %169, %cst_64 {dimension_numbers = #tpu.dot_dimension_numbers<[1], [0], [0], [1], [0, 0, 1, 1], [], []>} : vector<16x32xf32>, vector<32x64xf32>, vector<16x64xf32> -> vector<16x64xf32>
    %231 = vector.extract_strided_slice %166 {offsets = [4, 0], sizes = [1, 64], strides = [1, 1]} : vector<8x96xf32> to vector<1x64xf32>
    %232 = vector.broadcast %231 : vector<1x64xf32> to vector<16x64xf32>
    %233 = arith.addf %230, %232 : vector<16x64xf32>
    %cst_65 = arith.constant 5.000000e-01 : f32
    %234 = vector.broadcast %cst_65 : f32 to vector<16x64xf32>
    %235 = arith.mulf %234, %233 : vector<16x64xf32>
    %cst_66 = arith.constant 4.471500e-02 : f32
    %236 = vector.broadcast %cst_66 : f32 to vector<16x64xf32>
    %237 = arith.mulf %236, %233 : vector<16x64xf32>
    %238 = arith.mulf %237, %233 : vector<16x64xf32>
    %239 = arith.mulf %238, %233 : vector<16x64xf32>
    %240 = arith.addf %233, %239 : vector<16x64xf32>
    %cst_67 = arith.constant 0.797884583 : f32
    %241 = vector.broadcast %cst_67 : f32 to vector<16x64xf32>
    %242 = arith.mulf %241, %240 : vector<16x64xf32>
    %243 = math.tanh %242 : vector<16x64xf32>
    %cst_68 = arith.constant 1.000000e+00 : f32
    %244 = vector.broadcast %cst_68 : f32 to vector<16x64xf32>
    %245 = arith.addf %244, %243 : vector<16x64xf32>
    %246 = arith.mulf %235, %245 : vector<16x64xf32>
    %cst_69 = arith.constant dense<0.000000e+00> : vector<16x32xf32>
    %247 = tpu.matmul %246, %170, %cst_69 {dimension_numbers = #tpu.dot_dimension_numbers<[1], [0], [0], [1], [0, 0, 1, 1], [], []>} : vector<16x64xf32>, vector<64x32xf32>, vector<16x32xf32> -> vector<16x32xf32>
    %248 = vector.extract_strided_slice %166 {offsets = [5, 0], sizes = [1, 32], strides = [1, 1]} : vector<8x96xf32> to vector<1x32xf32>
    %249 = vector.broadcast %248 : vector<1x32xf32> to vector<16x32xf32>
    %250 = arith.addf %247, %249 : vector<16x32xf32>
    %251 = arith.addf %250, %229 : vector<16x32xf32>
    %252 = vector.extract_strided_slice %166 {offsets = [6, 0], sizes = [1, 32], strides = [1, 1]} : vector<8x96xf32> to vector<1x32xf32>
    %253 = vector.extract_strided_slice %166 {offsets = [7, 0], sizes = [1, 32], strides = [1, 1]} : vector<8x96xf32> to vector<1x32xf32>
    %cst_70 = arith.constant dense<0.000000e+00> : vector<16xf32>
    %254 = vector.multi_reduction <add>, %251, %cst_70 [1] : vector<16x32xf32> to vector<16xf32>
    %255 = vector.shape_cast %254 : vector<16xf32> to vector<16x1xf32>
    %cst_71 = arith.constant 3.200000e+01 : f32
    %256 = vector.broadcast %cst_71 : f32 to vector<16x1xf32>
    %257 = arith.divf %255, %256 : vector<16x1xf32>
    %258 = vector.broadcast %257 : vector<16x1xf32> to vector<16x32xf32>
    %259 = arith.subf %251, %258 : vector<16x32xf32>
    %260 = arith.mulf %259, %259 : vector<16x32xf32>
    %cst_72 = arith.constant dense<0.000000e+00> : vector<16xf32>
    %261 = vector.multi_reduction <add>, %260, %cst_72 [1] : vector<16x32xf32> to vector<16xf32>
    %262 = vector.shape_cast %261 : vector<16xf32> to vector<16x1xf32>
    %cst_73 = arith.constant 3.200000e+01 : f32
    %263 = vector.broadcast %cst_73 : f32 to vector<16x1xf32>
    %264 = arith.divf %262, %263 : vector<16x1xf32>
    %cst_74 = arith.constant 9.99999996E-13 : f32
    %265 = vector.broadcast %cst_74 : f32 to vector<16x1xf32>
    %266 = arith.addf %264, %265 : vector<16x1xf32>
    %267 = math.rsqrt %266 : vector<16x1xf32>
    %268 = vector.broadcast %267 : vector<16x1xf32> to vector<16x32xf32>
    %269 = arith.mulf %259, %268 : vector<16x32xf32>
    %270 = vector.broadcast %252 : vector<1x32xf32> to vector<16x32xf32>
    %271 = arith.mulf %269, %270 : vector<16x32xf32>
    %272 = vector.broadcast %253 : vector<1x32xf32> to vector<16x32xf32>
    %273 = arith.addf %271, %272 : vector<16x32xf32>
    %c0_75 = arith.constant 0 : index
    %c0_76 = arith.constant 0 : index
    %274 = vector.load %arg5[%c0_75, %c0_76] : memref<64x128xf32, #tpu.memory_space<vmem>>, vector<32x32xf32>
    %cst_77 = arith.constant dense<0.000000e+00> : vector<16x32xf32>
    %275 = tpu.matmul %273, %274, %cst_77 {dimension_numbers = #tpu.dot_dimension_numbers<[1], [0], [0], [1], [0, 0, 1, 1], [], []>} : vector<16x32xf32>, vector<32x32xf32>, vector<16x32xf32> -> vector<16x32xf32>
    %c2 = arith.constant 2 : index
    %c0_78 = arith.constant 0 : index
    %276 = vector.load %arg6[%c2, %c0_78] : memref<4x128xf32, #tpu.memory_space<vmem>>, vector<1x32xf32>
    %277 = vector.broadcast %276 : vector<1x32xf32> to vector<16x32xf32>
    %278 = arith.addf %275, %277 : vector<16x32xf32>
    %279 = math.tanh %278 : vector<16x32xf32>
    %c32 = arith.constant 32 : index
    %c0_79 = arith.constant 0 : index
    %280 = vector.load %arg5[%c32, %c0_79] : memref<64x128xf32, #tpu.memory_space<vmem>>, vector<32x128xf32>
    %cst_80 = arith.constant dense<0.000000e+00> : vector<16x128xf32>
    %281 = tpu.matmul %279, %280, %cst_80 {dimension_numbers = #tpu.dot_dimension_numbers<[1], [0], [0], [1], [0, 0, 1, 1], [], []>} : vector<16x32xf32>, vector<32x128xf32>, vector<16x128xf32> -> vector<16x128xf32>
    %c3 = arith.constant 3 : index
    %c0_81 = arith.constant 0 : index
    %282 = vector.load %arg6[%c3, %c0_81] : memref<4x128xf32, #tpu.memory_space<vmem>>, vector<1x128xf32>
    %283 = vector.broadcast %282 : vector<1x128xf32> to vector<16x128xf32>
    %284 = arith.addf %281, %283 : vector<16x128xf32>
    %c0_82 = arith.constant 0 : index
    %c0_83 = arith.constant 0 : index
    %285 = vector.load %arg7[%c0_82, %c0_83] : memref<16x128xf32, #tpu.memory_space<vmem>>, vector<16x128xf32>
    tpu.vector_store %arg7[%c0_82, %c0_83], %284 {strides = array<i32>} : memref<16x128xf32, #tpu.memory_space<vmem>>, vector<16x128xf32>,
    return
  }
}

</mosaic_0001>

<llo_original>
// kernel: bert_classifier_forward.1
$region0: #{bert_classifier_forward.1}
  #allocation0 [shape = 'u32[]', space=smem, size = 0x4, offset = 0x4, fixed_abs, tag = 'smem constant byte address 0x4 - core index']
  #allocation1 [shape = 'u32[72,128]{1,0:T(1,128)}', space=vmem, size = 0x9000, scoped, tag = 'internal scratch']
  %s0 = inlined_call_operand.vmem [shape: s32[16,2], index: 0, kind: input, shape index: {}]
  %s1 = inlined_call_operand.vmem [shape: s32[1,16], index: 1, kind: input, shape index: {}]
  %s2 = inlined_call_operand.vmem [shape: f32[80,32], index: 2, kind: input, shape index: {}]
  %s3 = inlined_call_operand.vmem [shape: f32[2,128,96], index: 3, kind: input, shape index: {}]
  %s4 = inlined_call_operand.vmem [shape: f32[2,8,96], index: 4, kind: input, shape index: {}]
  %s5 = inlined_call_operand.vmem [shape: f32[64,128], index: 5, kind: input, shape index: {}]
  %s6 = inlined_call_operand.vmem [shape: f32[4,128], index: 6, kind: input, shape index: {}]
  %s7 = inlined_call_operand.vmem [shape: f32[16,128], index: 7, kind: output, shape index: {}]
  %s8 = sld [smem:[#allocation0]]
  $region38: #{bert_classifier_forward.1} parent=0
    _
  %s10 = ssub.s32 1, %s8
  %s11 = scalar_select 0, %s10, %s8
  // Predicated region
  $region2: #{bert_classifier_forward.1} parent=0 // pred_check
    _
  $region3: #{bert_classifier_forward.1} parent=0 // pred_check_branch
    %13 = sbr.rel (0) target = $region5
  $region4: #{bert_classifier_forward.1} parent=0 // pred_region
    _
  $region5: #{bert_classifier_forward.1} parent=0 // pred_fallthru
    _
  // Predicated region
  $region6: #{bert_classifier_forward.1} parent=0 // pred_check
    _
  $region7: #{bert_classifier_forward.1} parent=0 // pred_check_branch
    %15 = sbr.rel (0) target = $region9
  $region8: #{bert_classifier_forward.1} parent=0 // pred_region
    _
  $region9: #{bert_classifier_forward.1} parent=0 // pred_fallthru
    _
  // Predicated region
  $region10: #{bert_classifier_forward.1} parent=0 // pred_check
    _
  $region11: #{bert_classifier_forward.1} parent=0 // pred_check_branch
    %17 = sbr.rel (0) target = $region13
  $region12: #{bert_classifier_forward.1} parent=0 // pred_region
    _
  $region13: #{bert_classifier_forward.1} parent=0 // pred_fallthru
    _
  // Predicated region
  $region14: #{bert_classifier_forward.1} parent=0 // pred_check
    _
  $region15: #{bert_classifier_forward.1} parent=0 // pred_check_branch
    %19 = sbr.rel (0) target = $region17
  $region16: #{bert_classifier_forward.1} parent=0 // pred_region
    _
  $region17: #{bert_classifier_forward.1} parent=0 // pred_fallthru
    _
  // Predicated region
  $region18: #{bert_classifier_forward.1} parent=0 // pred_check
    _
  $region19: #{bert_classifier_forward.1} parent=0 // pred_check_branch
    %21 = sbr.rel (0) target = $region21
  $region20: #{bert_classifier_forward.1} parent=0 // pred_region
    _
  $region21: #{bert_classifier_forward.1} parent=0 // pred_fallthru
    _
  // Predicated region
  $region22: #{bert_classifier_forward.1} parent=0 // pred_check
    _
  $region23: #{bert_classifier_forward.1} parent=0 // pred_check_branch
    %23 = sbr.rel (0) target = $region25
  $region24: #{bert_classifier_forward.1} parent=0 // pred_region
    _
  $region25: #{bert_classifier_forward.1} parent=0 // pred_fallthru
    _
  // Predicated region
  $region26: #{bert_classifier_forward.1} parent=0 // pred_check
    _
  $region27: #{bert_classifier_forward.1} parent=0 // pred_check_branch
    %25 = sbr.rel (0) target = $region29
  $region28: #{bert_classifier_forward.1} parent=0 // pred_region
    _
  $region29: #{bert_classifier_forward.1} parent=0 // pred_fallthru
    _
  %v26 = vld [vmem:[%s0] sm:$0xff]
  %v27 = vld [vmem:[%s0 + $0x8] sm:$0xff]
  %v28 = vlaneseq
  %v29 = vand.u32 %v28, 127
  %30 = vset.pattern.permute.xlu0 0
  %31 = vperm.xlu0 %30, %v26
  %v32 = vpop.permute.xlu0 %31
  %33 = vset.pattern.permute.xlu0 0
  %34 = vperm.xlu0 %33, %v27
  %v35 = vpop.permute.xlu0 %34
  %vm36 = vcmp.eq.s32.totalorder %v29, %v32
  %vm37 = vcmp.eq.s32.totalorder %v29, %v35
  %38 = vset.pattern.permute.xlu0 1
  %39 = vperm.xlu0 %38, %v26
  %v40 = vpop.permute.xlu0 %39
  %41 = vset.pattern.permute.xlu0 1
  %42 = vperm.xlu0 %41, %v27
  %v43 = vpop.permute.xlu0 %42
  %vm44 = vcmp.eq.s32.totalorder %v29, %v40
  %vm45 = vcmp.eq.s32.totalorder %v29, %v43
  %vm46 = vmor %vm36, %vm44
  %vm47 = vmor %vm37, %vm45
  %v48 = vsel %vm46, 1, 0
  %v49 = vsel %vm47, 1, 0
  %v50 = vcvt.s32.f32 %v48
  %v51 = vcvt.s32.f32 %v49
  %v52 = vld [vmem:[%s2] sm:$0xff]
  %v53 = vld [vmem:[%s2 + $0x8] sm:$0xff]
  %v54 = vld [vmem:[%s2 + $0x10] sm:$0xff]
  %v55 = vld [vmem:[%s2 + $0x18] sm:$0xff]
  %v56 = vld [vmem:[%s2 + $0x20] sm:$0xff]
  %v57 = vld [vmem:[%s2 + $0x28] sm:$0xff]
  %v58 = vld [vmem:[%s2 + $0x30] sm:$0xff]
  %v59 = vld [vmem:[%s2 + $0x38] sm:$0xff]
  %v60 = vld [vmem:[%s2 + $0x40] sm:$0xff]
  %v61 = vld [vmem:[%s2 + $0x48] sm:$0xff]
  %vm62 = vcmask 654336
  %v64 = vsel %vm62, %v50, 0
  %v67 = vsel %vm62, %v51, 0
  %69 = vmatpush.msra.mxu0 0.0
  %70 = vmatpush.msra.mxu0 0.0
  %71 = vmatpush.msra.mxu0 0.0
  %72 = vmatpush.msra.mxu0 0.0
  %73 = vmatpush.msra.mxu0 0.0
  %74 = vmatpush.msra.mxu0 0.0
  %75 = vmatpush.msra.mxu0 %v61
  %76 = vmatpush.msra.mxu0 %v60
  %77 = vmatpush.msra.mxu0 %v59
  %78 = vmatpush.msra.mxu0 %v58
  %79 = vmatpush.msra.mxu0 %v57
  %80 = vmatpush.msra.mxu0 %v56
  %81 = vmatpush.msra.mxu0 %v55
  %82 = vmatpush.msra.mxu0 %v54
  %83 = vmatpush.msra.mxu0 %v53
  %84 = vmatpush.msra.mxu0 %v52
  %85 = vmatmul.f32.gmra.mxu0 %v64
  %v86 = vpop.f32.mrf.mxu0
  %v87 = vadd.f32 0.0, %v86
  %88 = vmatmul.f32.gmra.mxu0 %v67
  %v89 = vpop.f32.mrf.mxu0
  %v90 = vadd.f32 0.0, %v89
  %91 = vdwg.mxu0
  %v92 = vld [vmem:[%s6] sm:$0x1]
  %v93 = vld [vmem:[%s6 + $0x1] sm:$0x1]
  %vm94 = vcmask 261120
  %v95 = vsel %vm94, %v87, 0.0
  %96 = vadd.xlane.f32.xlu0 %v95
  %v97 = vpop.xlane.xlu0 %96
  %v98 = vsel %vm94, %v90, 0.0
  %99 = vadd.xlane.f32.xlu0 %v98
  %v100 = vpop.xlane.xlu0 %99
  %v101 = vrcp.pop 32.0
  %v102 = vmul.f32 32.0, %v101
  %v103 = vsub.f32 1.0, %v102
  %v104 = vmul.f32 %v101, %v103
  %v105 = vadd.f32 %v101, %v104
  %vm106 = vweird.f32 %v101
  %v107 = vsel %vm106, %v101, %v105
  %v108 = vmul.f32 %v97, %v107
  %v109 = vmul.f32 %v100, %v107
  %v110 = vsub.f32 %v87, %v108
  %v111 = vsub.f32 %v90, %v109
  %v112 = vmul.f32 %v110, %v110
  %v113 = vmul.f32 %v111, %v111
  %v114 = vsel %vm94, %v112, 0.0
  %115 = vadd.xlane.f32.xlu0 %v114
  %v116 = vpop.xlane.xlu0 %115
  %v117 = vsel %vm94, %v113, 0.0
  %118 = vadd.xlane.f32.xlu0 %v117
  %v119 = vpop.xlane.xlu0 %118
  %v120 = vmul.f32 %v116, %v107
  %v121 = vmul.f32 %v119, %v107
  %v122 = vadd.f32 %v120, 1e-12
  %v123 = vadd.f32 %v121, 1e-12
  %v124 = vrsqrt.pop %v122
  %v125 = vmul.f32 %v124, %v122
  %v126 = vmul.f32 %v125, %v124
  %v127 = vmul.f32 0.5, %v126
  %v128 = vsub.f32 1.5, %v127
  %v129 = vmul.f32 %v124, %v128
  %vm130 = vweird.f32 %v122
  %vm131 = vweird.f32 %v124
  %vm132 = vmor %vm130, %vm131
  %v133 = vsel %vm132, %v124, %v129
  %v134 = vrsqrt.pop %v123
  %v135 = vmul.f32 %v134, %v123
  %v136 = vmul.f32 %v135, %v134
  %v137 = vmul.f32 0.5, %v136
  %v138 = vsub.f32 1.5, %v137
  %v139 = vmul.f32 %v134, %v138
  %vm140 = vweird.f32 %v123
  %vm141 = vweird.f32 %v134
  %vm142 = vmor %vm140, %vm141
  %v143 = vsel %vm142, %v134, %v139
  %v144 = vmul.f32 %v110, %v133
  %v145 = vmul.f32 %v111, %v143
  %v146 = vperm.slane %v92, 0
  %v147 = vmul.f32 %v144, %v146
  %v148 = vmul.f32 %v145, %v146
  %v149 = vperm.slane %v93, 0
  %v150 = vadd.f32 %v147, %v149
  %v151 = vadd.f32 %v148, %v149
  %v152 = vld [vmem:[%s1] sm:$0x1]
  %v153 = vcvt.s32.f32 %v152
  %v154 = vsub.f32 %v153, 1.0
  %v155 = vmul.f32 %v154, 1e+09
  %v157 = vperm.slane %v155, 0
  %158 = vrot.lane.b32.xlu0 %v157, 16
  %v159 = vpop.permute.xlu0 %158
  %vm161 = vcmask 130048
  %v162 = vsel %vm161, %v155, %v159
  %v163 = vlaneseq
  %v164 = vshrl.u32 %v163, 7
  %v165 = vadd.s32 %v164, 8
  %v166 = vadd.s32 %v164, 16
  %v167 = vadd.s32 %v164, 24
  %v168 = vxor.u32 %v164, %v29
  %v169 = vxor.u32 %v165, %v29
  %v170 = vxor.u32 %v166, %v29
  %v171 = vxor.u32 %v167, %v29
  %vm172 = vcmp.lt.s32.totalorder %v168, 8
  %vm173 = vcmp.lt.s32.totalorder %v169, 8
  %vm174 = vcmp.lt.s32.totalorder %v170, 8
  %vm175 = vcmp.lt.s32.totalorder %v171, 8
  %v176 = vsel %vm172, 0.0, -1e+09
  %v177 = vsel %vm173, 0.0, -1e+09
  %v178 = vsel %vm174, 0.0, -1e+09
  %v179 = vsel %vm175, 0.0, -1e+09
  %v180 = vperm.slane %v162, 0
  %v181 = vadd.f32 %v176, %v180
  %v182 = vadd.f32 %v177, %v180
  %v183 = vadd.f32 %v178, %v180
  %v184 = vadd.f32 %v179, %v180
  %v185 = vld [vmem:[%s3] sm:$0xff]
  %v186 = vld [vmem:[%s3 + $0x8] sm:$0xff]
  %v187 = vld [vmem:[%s3 + $0x10] sm:$0xff]
  %v188 = vld [vmem:[%s3 + $0x18] sm:$0xff]
  %v189 = vld [vmem:[%s3 + $0x20] sm:$0xff]
  %v190 = vld [vmem:[%s3 + $0x28] sm:$0xff]
  %v191 = vld [vmem:[%s3 + $0x30] sm:$0xff]
  %v192 = vld [vmem:[%s3 + $0x38] sm:$0xff]
  %v193 = vld [vmem:[%s3 + $0x40] sm:$0xff]
  %v194 = vld [vmem:[%s3 + $0x48] sm:$0xff]
  %v195 = vld [vmem:[%s3 + $0x50] sm:$0xff]
  %v196 = vld [vmem:[%s3 + $0x58] sm:$0xff]
  %v197 = vld [vmem:[%s3 + $0x60] sm:$0xff]
  %v198 = vld [vmem:[%s3 + $0x68] sm:$0xff]
  %v199 = vld [vmem:[%s3 + $0x70] sm:$0xff]
  %v200 = vld [vmem:[%s3 + $0x78] sm:$0xff]
  %v201 = vld [vmem:[%s4] sm:$0xff]
  %v202 = vperm.slane %v201, 0
  %v204 = vsel %vm94, %v150, 0
  %v207 = vsel %vm94, %v151, 0
  %209 = vmatpush.msra.mxu0 0.0
  %210 = vmatpush.msra.mxu0 0.0
  %211 = vmatpush.msra.mxu0 0.0
  %212 = vmatpush.msra.mxu0 0.0
  %213 = vmatpush.msra.mxu0 0.0
  %214 = vmatpush.msra.mxu0 0.0
  %215 = vmatpush.msra.mxu0 0.0
  %216 = vmatpush.msra.mxu0 0.0
  %217 = vmatpush.msra.mxu0 0.0
  %218 = vmatpush.msra.mxu0 0.0
  %219 = vmatpush.msra.mxu0 0.0
  %220 = vmatpush.msra.mxu0 0.0
  %221 = vmatpush.msra.mxu0 %v188
  %222 = vmatpush.msra.mxu0 %v187
  %223 = vmatpush.msra.mxu0 %v186
  %224 = vmatpush.msra.mxu0 %v185
  %225 = vmatmul.f32.gmra.mxu0 %v204
  %v226 = vpop.f32.mrf.mxu0
  %v227 = vadd.f32 %v202, %v226
  %228 = vmatmul.f32.gmra.mxu0 %v207
  %v229 = vpop.f32.mrf.mxu0
  %v230 = vadd.f32 %v202, %v229
  %231 = vdwg.mxu0
  %234 = vrot.lane.b32.xlu0 %v227, 112
  %v235 = vpop.permute.xlu0 %234
  %236 = vrot.lane.b32.xlu0 %v230, 112
  %v237 = vpop.permute.xlu0 %236
  %238 = vrot.lane.b32.xlu0 %v227, 96
  %v239 = vpop.permute.xlu0 %238
  %240 = vrot.lane.b32.xlu0 %v230, 96
  %v241 = vpop.permute.xlu0 %240
  %242 = vrot.lane.b32.xlu0 %v235, 96
  %v243 = vpop.permute.xlu0 %242
  %244 = vrot.lane.b32.xlu0 %v237, 96
  %v245 = vpop.permute.xlu0 %244
  %v246 = vsel %vm161, %v227, 0
  %v248 = vsel %vm161, %v230, 0
  %v250 = vsel %vm161, %v235, 0
  %v252 = vsel %vm161, %v237, 0
  %v254 = vsel %vm161, %v239, 0
  %v256 = vsel %vm161, %v241, 0
  %v258 = vsel %vm161, %v243, 0
  %v260 = vsel %vm161, %v245, 0
  %262 = vmatpush.xpose.msra.mxu0 0.0
  %263 = vmatpush.xpose.msra.mxu0 0.0
  %264 = vmatpush.xpose.msra.mxu0 0.0
  %265 = vmatpush.xpose.msra.mxu0 0.0
  %266 = vmatpush.xpose.msra.mxu0 0.0
  %267 = vmatpush.xpose.msra.mxu0 0.0
  %268 = vmatpush.xpose.msra.mxu0 0.0
  %269 = vmatpush.xpose.msra.mxu0 0.0
  %270 = vmatpush.xpose.msra.mxu0 0.0
  %271 = vmatpush.xpose.msra.mxu0 0.0
  %272 = vmatpush.xpose.msra.mxu0 0.0
  %273 = vmatpush.xpose.msra.mxu0 0.0
  %274 = vmatpush.xpose.msra.mxu0 %v260
  %275 = vmatpush.xpose.msra.mxu0 %v258
  %276 = vmatpush.xpose.msra.mxu0 %v256
  %277 = vmatpush.xpose.msra.mxu0 %v254
  %278 = vmatmul.f32.gmra.mxu0 %v246
  %v279 = vpop.f32.mrf.mxu0
  %v280 = vadd.f32 %v181, %v279
  %281 = vmatmul.f32.gmra.mxu0 %v248
  %v282 = vpop.f32.mrf.mxu0
  %v283 = vadd.f32 %v182, %v282
  %284 = vmatmul.f32.gmra.mxu0 %v250
  %v285 = vpop.f32.mrf.mxu0
  %v286 = vadd.f32 %v183, %v285
  %287 = vmatmul.f32.gmra.mxu0 %v252
  %v288 = vpop.f32.mrf.mxu0
  %v289 = vadd.f32 %v184, %v288
  %290 = vdwg.mxu0
  %v291 = vsel %vm94, %v280, -inf
  %292 = vmax.xlane.f32.xlu0 %v291
  %v293 = vpop.xlane.xlu0 %292
  %v294 = vsel %vm94, %v283, -inf
  %295 = vmax.xlane.f32.xlu0 %v294
  %v296 = vpop.xlane.xlu0 %295
  %v297 = vsel %vm94, %v286, -inf
  %298 = vmax.xlane.f32.xlu0 %v297
  %v299 = vpop.xlane.xlu0 %298
  %v300 = vsel %vm94, %v289, -inf
  %301 = vmax.xlane.f32.xlu0 %v300
  %v302 = vpop.xlane.xlu0 %301
  %v303 = vsub.f32 %v280, %v293
  %v304 = vsub.f32 %v283, %v296
  %v305 = vsub.f32 %v286, %v299
  %v306 = vsub.f32 %v289, %v302
  %v307 = vmul.f32 %v303, 1.442695
  %v308 = vpow.pop %v307
  %v309 = vmul.f32 %v304, 1.442695
  %v310 = vpow.pop %v309
  %v311 = vmul.f32 %v305, 1.442695
  %v312 = vpow.pop %v311
  %v313 = vmul.f32 %v306, 1.442695
  %v314 = vpow.pop %v313
  %v315 = vsel %vm94, %v308, 0.0
  %316 = vadd.xlane.f32.xlu0 %v315
  %v317 = vpop.xlane.xlu0 %316
  %v318 = vsel %vm94, %v310, 0.0
  %319 = vadd.xlane.f32.xlu0 %v318
  %v320 = vpop.xlane.xlu0 %319
  %v321 = vsel %vm94, %v312, 0.0
  %322 = vadd.xlane.f32.xlu0 %v321
  %v323 = vpop.xlane.xlu0 %322
  %v324 = vsel %vm94, %v314, 0.0
  %325 = vadd.xlane.f32.xlu0 %v324
  %v326 = vpop.xlane.xlu0 %325
  %v327 = vrcp.pop %v317
  %v328 = vrcp.pop %v320
  %v329 = vrcp.pop %v323
  %v330 = vrcp.pop %v326
  %v331 = vmul.f32 %v308, %v327
  %v332 = vmul.f32 %v310, %v328
  %v333 = vmul.f32 %v312, %v329
  %v334 = vmul.f32 %v314, %v330
  %335 = vrot.lane.b32.xlu0 %v227, 64
  %v336 = vpop.permute.xlu0 %335
  %337 = vrot.lane.b32.xlu0 %v230, 64
  %v338 = vpop.permute.xlu0 %337
  %339 = vrot.lane.b32.xlu0 %v235, 64
  %v340 = vpop.permute.xlu0 %339
  %341 = vrot.lane.b32.xlu0 %v237, 64
  %v342 = vpop.permute.xlu0 %341
  %v348 = vsel %vm94, %v331, 0
  %v351 = vsel %vm94, %v332, 0
  %v354 = vsel %vm94, %v333, 0
  %v357 = vsel %vm94, %v334, 0
  %359 = vmatpush.msra.mxu0 0.0
  %360 = vmatpush.msra.mxu0 0.0
  %361 = vmatpush.msra.mxu0 0.0
  %362 = vmatpush.msra.mxu0 0.0
  %363 = vmatpush.msra.mxu0 0.0
  %364 = vmatpush.msra.mxu0 0.0
  %365 = vmatpush.msra.mxu0 0.0
  %366 = vmatpush.msra.mxu0 0.0
  %367 = vmatpush.msra.mxu0 0.0
  %368 = vmatpush.msra.mxu0 0.0
  %369 = vmatpush.msra.mxu0 0.0
  %370 = vmatpush.msra.mxu0 0.0
  %371 = vmatpush.msra.mxu0 %v342
  %372 = vmatpush.msra.mxu0 %v340
  %373 = vmatpush.msra.mxu0 %v338
  %374 = vmatpush.msra.mxu0 %v336
  %375 = vmatmul.f32.gmra.mxu0 %v348
  %v376 = vpop.f32.mrf.mxu0
  %v377 = vadd.f32 0.0, %v376
  %378 = vmatmul.f32.gmra.mxu0 %v351
  %v379 = vpop.f32.mrf.mxu0
  %v380 = vadd.f32 0.0, %v379
  %381 = vmatmul.f32.gmra.mxu0 %v354
  %v382 = vpop.f32.mrf.mxu0
  %v383 = vadd.f32 0.0, %v382
  %384 = vmatmul.f32.gmra.mxu0 %v357
  %v385 = vpop.f32.mrf.mxu0
  %v386 = vadd.f32 0.0, %v385
  %387 = vdwg.mxu0
  %v389 = vsel %vm161, %v377, 0
  %v392 = vsel %vm161, %v380, 0
  %394 = vmatpush.msra.mxu0 0.0
  %395 = vmatpush.msra.mxu0 0.0
  %396 = vmatpush.msra.mxu0 0.0
  %397 = vmatpush.msra.mxu0 0.0
  %398 = vmatpush.msra.mxu0 0.0
  %399 = vmatpush.msra.mxu0 0.0
  %400 = vmatpush.msra.mxu0 0.0
  %401 = vmatpush.msra.mxu0 0.0
  %402 = vmatpush.msra.mxu0 0.0
  %403 = vmatpush.msra.mxu0 0.0
  %404 = vmatpush.msra.mxu0 0.0
  %405 = vmatpush.msra.mxu0 0.0
  %406 = vmatpush.msra.mxu0 0.0
  %407 = vmatpush.msra.mxu0 0.0
  %408 = vmatpush.msra.mxu0 %v190
  %409 = vmatpush.msra.mxu0 %v189
  %410 = vmatmul.f32.gmra.mxu0 %v389
  %v411 = vpop.f32.mrf.mxu0
  %v412 = vadd.f32 0.0, %v411
  %413 = vmatmul.f32.gmra.mxu0 %v392
  %v414 = vpop.f32.mrf.mxu0
  %v415 = vadd.f32 0.0, %v414
  %416 = vdwg.mxu0
  %v417 = vperm.slane %v201, 1
  %v418 = vadd.f32 %v417, %v412
  %v419 = vadd.f32 %v417, %v415
  %v421 = vsel %vm161, %v383, 0
  %v424 = vsel %vm161, %v386, 0
  %426 = vmatpush.msra.mxu0 0.0
  %427 = vmatpush.msra.mxu0 0.0
  %428 = vmatpush.msra.mxu0 0.0
  %429 = vmatpush.msra.mxu0 0.0
  %430 = vmatpush.msra.mxu0 0.0
  %431 = vmatpush.msra.mxu0 0.0
  %432 = vmatpush.msra.mxu0 0.0
  %433 = vmatpush.msra.mxu0 0.0
  %434 = vmatpush.msra.mxu0 0.0
  %435 = vmatpush.msra.mxu0 0.0
  %436 = vmatpush.msra.mxu0 0.0
  %437 = vmatpush.msra.mxu0 0.0
  %438 = vmatpush.msra.mxu0 0.0
  %439 = vmatpush.msra.mxu0 0.0
  %440 = vmatpush.msra.mxu0 %v192
  %441 = vmatpush.msra.mxu0 %v191
  %442 = vmatmul.f32.gmra.mxu0 %v421
  %v443 = vpop.f32.mrf.mxu0
  %v444 = vadd.f32 0.0, %v443
  %445 = vmatmul.f32.gmra.mxu0 %v424
  %v446 = vpop.f32.mrf.mxu0
  %v447 = vadd.f32 0.0, %v446
  %448 = vdwg.mxu0
  %v449 = vadd.f32 %v418, %v444
  %v450 = vadd.f32 %v419, %v447
  %v451 = vadd.f32 %v449, %v150
  %v452 = vadd.f32 %v450, %v151
  %v453 = vsel %vm94, %v451, 0.0
  %454 = vadd.xlane.f32.xlu0 %v453
  %v455 = vpop.xlane.xlu0 %454
  %v456 = vsel %vm94, %v452, 0.0
  %457 = vadd.xlane.f32.xlu0 %v456
  %v458 = vpop.xlane.xlu0 %457
  %v459 = vmul.f32 %v455, %v107
  %v460 = vmul.f32 %v458, %v107
  %v461 = vsub.f32 %v451, %v459
  %v462 = vsub.f32 %v452, %v460
  %v463 = vmul.f32 %v461, %v461
  %v464 = vmul.f32 %v462, %v462
  %v465 = vsel %vm94, %v463, 0.0
  %466 = vadd.xlane.f32.xlu0 %v465
  %v467 = vpop.xlane.xlu0 %466
  %v468 = vsel %vm94, %v464, 0.0
  %469 = vadd.xlane.f32.xlu0 %v468
  %v470 = vpop.xlane.xlu0 %469
  %v471 = vmul.f32 %v467, %v107
  %v472 = vmul.f32 %v470, %v107
  %v473 = vadd.f32 %v471, 1e-12
  %v474 = vadd.f32 %v472, 1e-12
  %v475 = vrsqrt.pop %v473
  %v476 = vmul.f32 %v475, %v473
  %v477 = vmul.f32 %v476, %v475
  %v478 = vmul.f32 0.5, %v477
  %v479 = vsub.f32 1.5, %v478
  %v480 = vmul.f32 %v475, %v479
  %vm481 = vweird.f32 %v473
  %vm482 = vweird.f32 %v475
  %vm483 = vmor %vm481, %vm482
  %v484 = vsel %vm483, %v475, %v480
  %v485 = vrsqrt.pop %v474
  %v486 = vmul.f32 %v485, %v474
  %v487 = vmul.f32 %v486, %v485
  %v488 = vmul.f32 0.5, %v487
  %v489 = vsub.f32 1.5, %v488
  %v490 = vmul.f32 %v485, %v489
  %vm491 = vweird.f32 %v474
  %vm492 = vweird.f32 %v485
  %vm493 = vmor %vm491, %vm492
  %v494 = vsel %vm493, %v485, %v490
  %v495 = vmul.f32 %v461, %v484
  %v496 = vmul.f32 %v462, %v494
  %v497 = vperm.slane %v201, 2
  %v498 = vmul.f32 %v495, %v497
  %v499 = vmul.f32 %v496, %v497
  %v500 = vperm.slane %v201, 3
  %v501 = vadd.f32 %v498, %v500
  %v502 = vadd.f32 %v499, %v500
  %v503 = vperm.slane %v201, 4
  %508 = vrot.lane.b32.xlu0 %v189, 96
  %v509 = vpop.permute.xlu0 %508
  %510 = vrot.lane.b32.xlu0 %v190, 96
  %v511 = vpop.permute.xlu0 %510
  %512 = vrot.lane.b32.xlu0 %v191, 96
  %v513 = vpop.permute.xlu0 %512
  %514 = vrot.lane.b32.xlu0 %v192, 96
  %v515 = vpop.permute.xlu0 %514
  %v521 = vsel %vm94, %v501, 0
  %v524 = vsel %vm94, %v502, 0
  %526 = vmatpush.msra.mxu0 0.0
  %527 = vmatpush.msra.mxu0 0.0
  %528 = vmatpush.msra.mxu0 0.0
  %529 = vmatpush.msra.mxu0 0.0
  %530 = vmatpush.msra.mxu0 0.0
  %531 = vmatpush.msra.mxu0 0.0
  %532 = vmatpush.msra.mxu0 0.0
  %533 = vmatpush.msra.mxu0 0.0
  %534 = vmatpush.msra.mxu0 0.0
  %535 = vmatpush.msra.mxu0 0.0
  %536 = vmatpush.msra.mxu0 0.0
  %537 = vmatpush.msra.mxu0 0.0
  %538 = vmatpush.msra.mxu0 %v515
  %539 = vmatpush.msra.mxu0 %v513
  %540 = vmatpush.msra.mxu0 %v511
  %541 = vmatpush.msra.mxu0 %v509
  %542 = vmatmul.f32.gmra.mxu0 %v521
  %v543 = vpop.f32.mrf.mxu0
  %v544 = vadd.f32 %v503, %v543
  %545 = vmatmul.f32.gmra.mxu0 %v524
  %v546 = vpop.f32.mrf.mxu0
  %v547 = vadd.f32 %v503, %v546
  %548 = vdwg.mxu0
  %v549 = vmul.f32 %v544, 0.5
  %v550 = vmul.f32 %v547, 0.5
  %v551 = vmul.f32 %v544, 0.044715
  %v552 = vmul.f32 %v547, 0.044715
  %v553 = vmul.f32 %v551, %v544
  %v554 = vmul.f32 %v552, %v547
  %v555 = vmul.f32 %v553, %v544
  %v556 = vmul.f32 %v554, %v547
  %v557 = vadd.f32 %v544, %v555
  %v558 = vadd.f32 %v547, %v556
  %v559 = vmul.f32 %v557, 0.7978846
  %v560 = vmul.f32 %v558, 0.7978846
  %v561 = vtanh.pop %v559
  %v562 = vtanh.pop %v560
  %v563 = vadd.f32 %v561, 1.0
  %v564 = vadd.f32 %v562, 1.0
  %v565 = vmul.f32 %v549, %v563
  %v566 = vmul.f32 %v550, %v564
  %v567 = vperm.slane %v201, 5
  %vm568 = vcmask 523264
  %v570 = vsel %vm568, %v565, 0
  %v573 = vsel %vm568, %v566, 0
  %575 = vmatpush.msra.mxu0 0.0
  %576 = vmatpush.msra.mxu0 0.0
  %577 = vmatpush.msra.mxu0 0.0
  %578 = vmatpush.msra.mxu0 0.0
  %579 = vmatpush.msra.mxu0 0.0
  %580 = vmatpush.msra.mxu0 0.0
  %581 = vmatpush.msra.mxu0 0.0
  %582 = vmatpush.msra.mxu0 0.0
  %583 = vmatpush.msra.mxu0 %v200
  %584 = vmatpush.msra.mxu0 %v199
  %585 = vmatpush.msra.mxu0 %v198
  %586 = vmatpush.msra.mxu0 %v197
  %587 = vmatpush.msra.mxu0 %v196
  %588 = vmatpush.msra.mxu0 %v195
  %589 = vmatpush.msra.mxu0 %v194
  %590 = vmatpush.msra.mxu0 %v193
  %591 = vmatmul.f32.gmra.mxu0 %v570
  %v592 = vpop.f32.mrf.mxu0
  %v593 = vadd.f32 %v567, %v592
  %594 = vmatmul.f32.gmra.mxu0 %v573
  %v595 = vpop.f32.mrf.mxu0
  %v596 = vadd.f32 %v567, %v595
  %597 = vdwg.mxu0
  %v598 = vadd.f32 %v593, %v501
  %v599 = vadd.f32 %v596, %v502
  %v600 = vsel %vm94, %v598, 0.0
  %601 = vadd.xlane.f32.xlu0 %v600
  %v602 = vpop.xlane.xlu0 %601
  %v603 = vsel %vm94, %v599, 0.0
  %604 = vadd.xlane.f32.xlu0 %v603
  %v605 = vpop.xlane.xlu0 %604
  %v606 = vmul.f32 %v602, %v107
  %v607 = vmul.f32 %v605, %v107
  %v608 = vsub.f32 %v598, %v606
  %v609 = vsub.f32 %v599, %v607
  %v610 = vmul.f32 %v608, %v608
  %v611 = vmul.f32 %v609, %v609
  %v612 = vsel %vm94, %v610, 0.0
  %613 = vadd.xlane.f32.xlu0 %v612
  %v614 = vpop.xlane.xlu0 %613
  %v615 = vsel %vm94, %v611, 0.0
  %616 = vadd.xlane.f32.xlu0 %v615
  %v617 = vpop.xlane.xlu0 %616
  %v618 = vmul.f32 %v614, %v107
  %v619 = vmul.f32 %v617, %v107
  %v620 = vadd.f32 %v618, 1e-12
  %v621 = vadd.f32 %v619, 1e-12
  %v622 = vrsqrt.pop %v620
  %v623 = vmul.f32 %v622, %v620
  %v624 = vmul.f32 %v623, %v622
  %v625 = vmul.f32 0.5, %v624
  %v626 = vsub.f32 1.5, %v625
  %v627 = vmul.f32 %v622, %v626
  %vm628 = vweird.f32 %v620
  %vm629 = vweird.f32 %v622
  %vm630 = vmor %vm628, %vm629
  %v631 = vsel %vm630, %v622, %v627
  %v632 = vrsqrt.pop %v621
  %v633 = vmul.f32 %v632, %v621
  %v634 = vmul.f32 %v633, %v632
  %v635 = vmul.f32 0.5, %v634
  %v636 = vsub.f32 1.5, %v635
  %v637 = vmul.f32 %v632, %v636
  %vm638 = vweird.f32 %v621
  %vm639 = vweird.f32 %v632
  %vm640 = vmor %vm638, %vm639
  %v641 = vsel %vm640, %v632, %v637
  %v642 = vmul.f32 %v608, %v631
  %v643 = vmul.f32 %v609, %v641
  %v644 = vperm.slane %v201, 6
  %v645 = vmul.f32 %v642, %v644
  %v646 = vmul.f32 %v643, %v644
  %v647 = vperm.slane %v201, 7
  %v648 = vadd.f32 %v645, %v647
  %v649 = vadd.f32 %v646, %v647
  %s650 = scalar_lea.vmem %s3, 128
  %v651 = vld [vmem:[%s650] sm:$0xff]
  %v652 = vld [vmem:[%s650 + $0x8] sm:$0xff]
  %v653 = vld [vmem:[%s650 + $0x10] sm:$0xff]
  %v654 = vld [vmem:[%s650 + $0x18] sm:$0xff]
  %v655 = vld [vmem:[%s650 + $0x20] sm:$0xff]
  %v656 = vld [vmem:[%s650 + $0x28] sm:$0xff]
  %v657 = vld [vmem:[%s650 + $0x30] sm:$0xff]
  %v658 = vld [vmem:[%s650 + $0x38] sm:$0xff]
  %v659 = vld [vmem:[%s650 + $0x40] sm:$0xff]
  %v660 = vld [vmem:[%s650 + $0x48] sm:$0xff]
  %v661 = vld [vmem:[%s650 + $0x50] sm:$0xff]
  %v662 = vld [vmem:[%s650 + $0x58] sm:$0xff]
  %v663 = vld [vmem:[%s650 + $0x60] sm:$0xff]
  %v664 = vld [vmem:[%s650 + $0x68] sm:$0xff]
  %v665 = vld [vmem:[%s650 + $0x70] sm:$0xff]
  %v666 = vld [vmem:[%s650 + $0x78] sm:$0xff]
  %s667 = scalar_lea.vmem %s4, 8
  %v668 = vld [vmem:[%s667] sm:$0xff]
  %v669 = vperm.slane %v668, 0
  %v671 = vsel %vm94, %v648, 0
  %v674 = vsel %vm94, %v649, 0
  %676 = vmatpush.msra.mxu0 0.0
  %677 = vmatpush.msra.mxu0 0.0
  %678 = vmatpush.msra.mxu0 0.0
  %679 = vmatpush.msra.mxu0 0.0
  %680 = vmatpush.msra.mxu0 0.0
  %681 = vmatpush.msra.mxu0 0.0
  %682 = vmatpush.msra.mxu0 0.0
  %683 = vmatpush.msra.mxu0 0.0
  %684 = vmatpush.msra.mxu0 0.0
  %685 = vmatpush.msra.mxu0 0.0
  %686 = vmatpush.msra.mxu0 0.0
  %687 = vmatpush.msra.mxu0 0.0
  %688 = vmatpush.msra.mxu0 %v654
  %689 = vmatpush.msra.mxu0 %v653
  %690 = vmatpush.msra.mxu0 %v652
  %691 = vmatpush.msra.mxu0 %v651
  %692 = vmatmul.f32.gmra.mxu0 %v671
  %v693 = vpop.f32.mrf.mxu0
  %v694 = vadd.f32 %v669, %v693
  %695 = vmatmul.f32.gmra.mxu0 %v674
  %v696 = vpop.f32.mrf.mxu0
  %v697 = vadd.f32 %v669, %v696
  %698 = vdwg.mxu0
  %701 = vrot.lane.b32.xlu0 %v694, 112
  %v702 = vpop.permute.xlu0 %701
  %703 = vrot.lane.b32.xlu0 %v697, 112
  %v704 = vpop.permute.xlu0 %703
  %705 = vrot.lane.b32.xlu0 %v694, 96
  %v706 = vpop.permute.xlu0 %705
  %707 = vrot.lane.b32.xlu0 %v697, 96
  %v708 = vpop.permute.xlu0 %707
  %709 = vrot.lane.b32.xlu0 %v702, 96
  %v710 = vpop.permute.xlu0 %709
  %711 = vrot.lane.b32.xlu0 %v704, 96
  %v712 = vpop.permute.xlu0 %711
  %v713 = vsel %vm161, %v694, 0
  %v715 = vsel %vm161, %v697, 0
  %v717 = vsel %vm161, %v702, 0
  %v719 = vsel %vm161, %v704, 0
  %v721 = vsel %vm161, %v706, 0
  %v723 = vsel %vm161, %v708, 0
  %v725 = vsel %vm161, %v710, 0
  %v727 = vsel %vm161, %v712, 0
  %729 = vmatpush.xpose.msra.mxu0 0.0
  %730 = vmatpush.xpose.msra.mxu0 0.0
  %731 = vmatpush.xpose.msra.mxu0 0.0
  %732 = vmatpush.xpose.msra.mxu0 0.0
  %733 = vmatpush.xpose.msra.mxu0 0.0
  %734 = vmatpush.xpose.msra.mxu0 0.0
  %735 = vmatpush.xpose.msra.mxu0 0.0
  %736 = vmatpush.xpose.msra.mxu0 0.0
  %737 = vmatpush.xpose.msra.mxu0 0.0
  %738 = vmatpush.xpose.msra.mxu0 0.0
  %739 = vmatpush.xpose.msra.mxu0 0.0
  %740 = vmatpush.xpose.msra.mxu0 0.0
  %741 = vmatpush.xpose.msra.mxu0 %v727
  %742 = vmatpush.xpose.msra.mxu0 %v725
  %743 = vmatpush.xpose.msra.mxu0 %v723
  %744 = vmatpush.xpose.msra.mxu0 %v721
  %745 = vmatmul.f32.gmra.mxu0 %v713
  %v746 = vpop.f32.mrf.mxu0
  %v747 = vadd.f32 %v181, %v746
  %748 = vmatmul.f32.gmra.mxu0 %v715
  %v749 = vpop.f32.mrf.mxu0
  %v750 = vadd.f32 %v182, %v749
  %751 = vmatmul.f32.gmra.mxu0 %v717
  %v752 = vpop.f32.mrf.mxu0
  %v753 = vadd.f32 %v183, %v752
  %754 = vmatmul.f32.gmra.mxu0 %v719
  %v755 = vpop.f32.mrf.mxu0
  %v756 = vadd.f32 %v184, %v755
  %757 = vdwg.mxu0
  %v758 = vsel %vm94, %v747, -inf
  %759 = vmax.xlane.f32.xlu0 %v758
  %v760 = vpop.xlane.xlu0 %759
  %v761 = vsel %vm94, %v750, -inf
  %762 = vmax.xlane.f32.xlu0 %v761
  %v763 = vpop.xlane.xlu0 %762
  %v764 = vsel %vm94, %v753, -inf
  %765 = vmax.xlane.f32.xlu0 %v764
  %v766 = vpop.xlane.xlu0 %765
  %v767 = vsel %vm94, %v756, -inf
  %768 = vmax.xlane.f32.xlu0 %v767
  %v769 = vpop.xlane.xlu0 %768
  %v770 = vsub.f32 %v747, %v760
  %v771 = vsub.f32 %v750, %v763
  %v772 = vsub.f32 %v753, %v766
  %v773 = vsub.f32 %v756, %v769
  %v774 = vmul.f32 %v770, 1.442695
  %v775 = vpow.pop %v774
  %v776 = vmul.f32 %v771, 1.442695
  %v777 = vpow.pop %v776
  %v778 = vmul.f32 %v772, 1.442695
  %v779 = vpow.pop %v778
  %v780 = vmul.f32 %v773, 1.442695
  %v781 = vpow.pop %v780
  %v782 = vsel %vm94, %v775, 0.0
  %783 = vadd.xlane.f32.xlu0 %v782
  %v784 = vpop.xlane.xlu0 %783
  %v785 = vsel %vm94, %v777, 0.0
  %786 = vadd.xlane.f32.xlu0 %v785
  %v787 = vpop.xlane.xlu0 %786
  %v788 = vsel %vm94, %v779, 0.0
  %789 = vadd.xlane.f32.xlu0 %v788
  %v790 = vpop.xlane.xlu0 %789
  %v791 = vsel %vm94, %v781, 0.0
  %792 = vadd.xlane.f32.xlu0 %v791
  %v793 = vpop.xlane.xlu0 %792
  %v794 = vrcp.pop %v784
  %v795 = vrcp.pop %v787
  %v796 = vrcp.pop %v790
  %v797 = vrcp.pop %v793
  %v798 = vmul.f32 %v775, %v794
  %v799 = vmul.f32 %v777, %v795
  %v800 = vmul.f32 %v779, %v796
  %v801 = vmul.f32 %v781, %v797
  %802 = vrot.lane.b32.xlu0 %v694, 64
  %v803 = vpop.permute.xlu0 %802
  %804 = vrot.lane.b32.xlu0 %v697, 64
  %v805 = vpop.permute.xlu0 %804
  %806 = vrot.lane.b32.xlu0 %v702, 64
  %v807 = vpop.permute.xlu0 %806
  %808 = vrot.lane.b32.xlu0 %v704, 64
  %v809 = vpop.permute.xlu0 %808
  %v815 = vsel %vm94, %v798, 0
  %v818 = vsel %vm94, %v799, 0
  %v821 = vsel %vm94, %v800, 0
  %v824 = vsel %vm94, %v801, 0
  %826 = vmatpush.msra.mxu0 0.0
  %827 = vmatpush.msra.mxu0 0.0
  %828 = vmatpush.msra.mxu0 0.0
  %829 = vmatpush.msra.mxu0 0.0
  %830 = vmatpush.msra.mxu0 0.0
  %831 = vmatpush.msra.mxu0 0.0
  %832 = vmatpush.msra.mxu0 0.0
  %833 = vmatpush.msra.mxu0 0.0
  %834 = vmatpush.msra.mxu0 0.0
  %835 = vmatpush.msra.mxu0 0.0
  %836 = vmatpush.msra.mxu0 0.0
  %837 = vmatpush.msra.mxu0 0.0
  %838 = vmatpush.msra.mxu0 %v809
  %839 = vmatpush.msra.mxu0 %v807
  %840 = vmatpush.msra.mxu0 %v805
  %841 = vmatpush.msra.mxu0 %v803
  %842 = vmatmul.f32.gmra.mxu0 %v815
  %v843 = vpop.f32.mrf.mxu0
  %v844 = vadd.f32 0.0, %v843
  %845 = vmatmul.f32.gmra.mxu0 %v818
  %v846 = vpop.f32.mrf.mxu0
  %v847 = vadd.f32 0.0, %v846
  %848 = vmatmul.f32.gmra.mxu0 %v821
  %v849 = vpop.f32.mrf.mxu0
  %v850 = vadd.f32 0.0, %v849
  %851 = vmatmul.f32.gmra.mxu0 %v824
  %v852 = vpop.f32.mrf.mxu0
  %v853 = vadd.f32 0.0, %v852
  %854 = vdwg.mxu0
  %v856 = vsel %vm161, %v844, 0
  %v859 = vsel %vm161, %v847, 0
  %861 = vmatpush.msra.mxu0 0.0
  %862 = vmatpush.msra.mxu0 0.0
  %863 = vmatpush.msra.mxu0 0.0
  %864 = vmatpush.msra.mxu0 0.0
  %865 = vmatpush.msra.mxu0 0.0
  %866 = vmatpush.msra.mxu0 0.0
  %867 = vmatpush.msra.mxu0 0.0
  %868 = vmatpush.msra.mxu0 0.0
  %869 = vmatpush.msra.mxu0 0.0
  %870 = vmatpush.msra.mxu0 0.0
  %871 = vmatpush.msra.mxu0 0.0
  %872 = vmatpush.msra.mxu0 0.0
  %873 = vmatpush.msra.mxu0 0.0
  %874 = vmatpush.msra.mxu0 0.0
  %875 = vmatpush.msra.mxu0 %v656
  %876 = vmatpush.msra.mxu0 %v655
  %877 = vmatmul.f32.gmra.mxu0 %v856
  %v878 = vpop.f32.mrf.mxu0
  %v879 = vadd.f32 0.0, %v878
  %880 = vmatmul.f32.gmra.mxu0 %v859
  %v881 = vpop.f32.mrf.mxu0
  %v882 = vadd.f32 0.0, %v881
  %883 = vdwg.mxu0
  %v884 = vperm.slane %v668, 1
  %v885 = vadd.f32 %v884, %v879
  %v886 = vadd.f32 %v884, %v882
  %v888 = vsel %vm161, %v850, 0
  %v891 = vsel %vm161, %v853, 0
  %893 = vmatpush.msra.mxu0 0.0
  %894 = vmatpush.msra.mxu0 0.0
  %895 = vmatpush.msra.mxu0 0.0
  %896 = vmatpush.msra.mxu0 0.0
  %897 = vmatpush.msra.mxu0 0.0
  %898 = vmatpush.msra.mxu0 0.0
  %899 = vmatpush.msra.mxu0 0.0
  %900 = vmatpush.msra.mxu0 0.0
  %901 = vmatpush.msra.mxu0 0.0
  %902 = vmatpush.msra.mxu0 0.0
  %903 = vmatpush.msra.mxu0 0.0
  %904 = vmatpush.msra.mxu0 0.0
  %905 = vmatpush.msra.mxu0 0.0
  %906 = vmatpush.msra.mxu0 0.0
  %907 = vmatpush.msra.mxu0 %v658
  %908 = vmatpush.msra.mxu0 %v657
  %909 = vmatmul.f32.gmra.mxu0 %v888
  %v910 = vpop.f32.mrf.mxu0
  %v911 = vadd.f32 0.0, %v910
  %912 = vmatmul.f32.gmra.mxu0 %v891
  %v913 = vpop.f32.mrf.mxu0
  %v914 = vadd.f32 0.0, %v913
  %915 = vdwg.mxu0
  %v916 = vadd.f32 %v885, %v911
  %v917 = vadd.f32 %v886, %v914
  %v918 = vadd.f32 %v916, %v648
  %v919 = vadd.f32 %v917, %v649
  %v920 = vsel %vm94, %v918, 0.0
  %921 = vadd.xlane.f32.xlu0 %v920
  %v922 = vpop.xlane.xlu0 %921
  %v923 = vsel %vm94, %v919, 0.0
  %924 = vadd.xlane.f32.xlu0 %v923
  %v925 = vpop.xlane.xlu0 %924
  %v926 = vmul.f32 %v922, %v107
  %v927 = vmul.f32 %v925, %v107
  %v928 = vsub.f32 %v918, %v926
  %v929 = vsub.f32 %v919, %v927
  %v930 = vmul.f32 %v928, %v928
  %v931 = vmul.f32 %v929, %v929
  %v932 = vsel %vm94, %v930, 0.0
  %933 = vadd.xlane.f32.xlu0 %v932
  %v934 = vpop.xlane.xlu0 %933
  %v935 = vsel %vm94, %v931, 0.0
  %936 = vadd.xlane.f32.xlu0 %v935
  %v937 = vpop.xlane.xlu0 %936
  %v938 = vmul.f32 %v934, %v107
  %v939 = vmul.f32 %v937, %v107
  %v940 = vadd.f32 %v938, 1e-12
  %v941 = vadd.f32 %v939, 1e-12
  %v942 = vrsqrt.pop %v940
  %v943 = vmul.f32 %v942, %v940
  %v944 = vmul.f32 %v943, %v942
  %v945 = vmul.f32 0.5, %v944
  %v946 = vsub.f32 1.5, %v945
  %v947 = vmul.f32 %v942, %v946
  %vm948 = vweird.f32 %v940
  %vm949 = vweird.f32 %v942
  %vm950 = vmor %vm948, %vm949
  %v951 = vsel %vm950, %v942, %v947
  %v952 = vrsqrt.pop %v941
  %v953 = vmul.f32 %v952, %v941
  %v954 = vmul.f32 %v953, %v952
  %v955 = vmul.f32 0.5, %v954
  %v956 = vsub.f32 1.5, %v955
  %v957 = vmul.f32 %v952, %v956
  %vm958 = vweird.f32 %v941
  %vm959 = vweird.f32 %v952
  %vm960 = vmor %vm958, %vm959
  %v961 = vsel %vm960, %v952, %v957
  %v962 = vmul.f32 %v928, %v951
  %v963 = vmul.f32 %v929, %v961
  %v964 = vperm.slane %v668, 2
  %v965 = vmul.f32 %v962, %v964
  %v966 = vmul.f32 %v963, %v964
  %v967 = vperm.slane %v668, 3
  %v968 = vadd.f32 %v965, %v967
  %v969 = vadd.f32 %v966, %v967
  %v970 = vperm.slane %v668, 4
  %975 = vrot.lane.b32.xlu0 %v655, 96
  %v976 = vpop.permute.xlu0 %975
  %977 = vrot.lane.b32.xlu0 %v656, 96
  %v978 = vpop.permute.xlu0 %977
  %979 = vrot.lane.b32.xlu0 %v657, 96
  %v980 = vpop.permute.xlu0 %979
  %981 = vrot.lane.b32.xlu0 %v658, 96
  %v982 = vpop.permute.xlu0 %981
  %v988 = vsel %vm94, %v968, 0
  %v991 = vsel %vm94, %v969, 0
  %993 = vmatpush.msra.mxu0 0.0
  %994 = vmatpush.msra.mxu0 0.0
  %995 = vmatpush.msra.mxu0 0.0
  %996 = vmatpush.msra.mxu0 0.0
  %997 = vmatpush.msra.mxu0 0.0
  %998 = vmatpush.msra.mxu0 0.0
  %999 = vmatpush.msra.mxu0 0.0
  %1000 = vmatpush.msra.mxu0 0.0
  %1001 = vmatpush.msra.mxu0 0.0
  %1002 = vmatpush.msra.mxu0 0.0
  %1003 = vmatpush.msra.mxu0 0.0
  %1004 = vmatpush.msra.mxu0 0.0
  %1005 = vmatpush.msra.mxu0 %v982
  %1006 = vmatpush.msra.mxu0 %v980
  %1007 = vmatpush.msra.mxu0 %v978
  %1008 = vmatpush.msra.mxu0 %v976
  %1009 = vmatmul.f32.gmra.mxu0 %v988
  %v1010 = vpop.f32.mrf.mxu0
  %v1011 = vadd.f32 %v970, %v1010
  %1012 = vmatmul.f32.gmra.mxu0 %v991
  %v1013 = vpop.f32.mrf.mxu0
  %v1014 = vadd.f32 %v970, %v1013
  %1015 = vdwg.mxu0
  %v1016 = vmul.f32 %v1011, 0.5
  %v1017 = vmul.f32 %v1014, 0.5
  %v1018 = vmul.f32 %v1011, 0.044715
  %v1019 = vmul.f32 %v1014, 0.044715
  %v1020 = vmul.f32 %v1018, %v1011
  %v1021 = vmul.f32 %v1019, %v1014
  %v1022 = vmul.f32 %v1020, %v1011
  %v1023 = vmul.f32 %v1021, %v1014
  %v1024 = vadd.f32 %v1011, %v1022
  %v1025 = vadd.f32 %v1014, %v1023
  %v1026 = vmul.f32 %v1024, 0.7978846
  %v1027 = vmul.f32 %v1025, 0.7978846
  %v1028 = vtanh.pop %v1026
  %v1029 = vtanh.pop %v1027
  %v1030 = vadd.f32 %v1028, 1.0
  %v1031 = vadd.f32 %v1029, 1.0
  %v1032 = vmul.f32 %v1016, %v1030
  %v1033 = vmul.f32 %v1017, %v1031
  %v1034 = vperm.slane %v668, 5
  %v1036 = vsel %vm568, %v1032, 0
  %v1039 = vsel %vm568, %v1033, 0
  %1041 = vmatpush.msra.mxu0 0.0
  %1042 = vmatpush.msra.mxu0 0.0
  %1043 = vmatpush.msra.mxu0 0.0
  %1044 = vmatpush.msra.mxu0 0.0
  %1045 = vmatpush.msra.mxu0 0.0
  %1046 = vmatpush.msra.mxu0 0.0
  %1047 = vmatpush.msra.mxu0 0.0
  %1048 = vmatpush.msra.mxu0 0.0
  %1049 = vmatpush.msra.mxu0 %v666
  %1050 = vmatpush.msra.mxu0 %v665
  %1051 = vmatpush.msra.mxu0 %v664
  %1052 = vmatpush.msra.mxu0 %v663
  %1053 = vmatpush.msra.mxu0 %v662
  %1054 = vmatpush.msra.mxu0 %v661
  %1055 = vmatpush.msra.mxu0 %v660
  %1056 = vmatpush.msra.mxu0 %v659
  %1057 = vmatmul.f32.gmra.mxu0 %v1036
  %v1058 = vpop.f32.mrf.mxu0
  %v1059 = vadd.f32 %v1034, %v1058
  %1060 = vmatmul.f32.gmra.mxu0 %v1039
  %v1061 = vpop.f32.mrf.mxu0
  %v1062 = vadd.f32 %v1034, %v1061
  %1063 = vdwg.mxu0
  %v1064 = vadd.f32 %v1059, %v968
  %v1065 = vadd.f32 %v1062, %v969
  %v1066 = vsel %vm94, %v1064, 0.0
  %1067 = vadd.xlane.f32.xlu0 %v1066
  %v1068 = vpop.xlane.xlu0 %1067
  %v1069 = vsel %vm94, %v1065, 0.0
  %1070 = vadd.xlane.f32.xlu0 %v1069
  %v1071 = vpop.xlane.xlu0 %1070
  %v1072 = vmul.f32 %v1068, %v107
  %v1073 = vmul.f32 %v1071, %v107
  %v1074 = vsub.f32 %v1064, %v1072
  %v1075 = vsub.f32 %v1065, %v1073
  %v1076 = vmul.f32 %v1074, %v1074
  %v1077 = vmul.f32 %v1075, %v1075
  %v1078 = vsel %vm94, %v1076, 0.0
  %1079 = vadd.xlane.f32.xlu0 %v1078
  %v1080 = vpop.xlane.xlu0 %1079
  %v1081 = vsel %vm94, %v1077, 0.0
  %1082 = vadd.xlane.f32.xlu0 %v1081
  %v1083 = vpop.xlane.xlu0 %1082
  %v1084 = vmul.f32 %v1080, %v107
  %v1085 = vmul.f32 %v1083, %v107
  %v1086 = vadd.f32 %v1084, 1e-12
  %v1087 = vadd.f32 %v1085, 1e-12
  %v1088 = vrsqrt.pop %v1086
  %v1089 = vmul.f32 %v1088, %v1086
  %v1090 = vmul.f32 %v1089, %v1088
  %v1091 = vmul.f32 0.5, %v1090
  %v1092 = vsub.f32 1.5, %v1091
  %v1093 = vmul.f32 %v1088, %v1092
  %vm1094 = vweird.f32 %v1086
  %vm1095 = vweird.f32 %v1088
  %vm1096 = vmor %vm1094, %vm1095
  %v1097 = vsel %vm1096, %v1088, %v1093
  %v1098 = vrsqrt.pop %v1087
  %v1099 = vmul.f32 %v1098, %v1087
  %v1100 = vmul.f32 %v1099, %v1098
  %v1101 = vmul.f32 0.5, %v1100
  %v1102 = vsub.f32 1.5, %v1101
  %v1103 = vmul.f32 %v1098, %v1102
  %vm1104 = vweird.f32 %v1087
  %vm1105 = vweird.f32 %v1098
  %vm1106 = vmor %vm1104, %vm1105
  %v1107 = vsel %vm1106, %v1098, %v1103
  %v1108 = vmul.f32 %v1074, %v1097
  %v1109 = vmul.f32 %v1075, %v1107
  %v1110 = vperm.slane %v668, 6
  %v1111 = vmul.f32 %v1108, %v1110
  %v1112 = vmul.f32 %v1109, %v1110
  %v1113 = vperm.slane %v668, 7
  %v1114 = vadd.f32 %v1111, %v1113
  %v1115 = vadd.f32 %v1112, %v1113
  %v1116 = vld [vmem:[%s5] sm:$0xff]
  %v1117 = vld [vmem:[%s5 + $0x8] sm:$0xff]
  %v1118 = vld [vmem:[%s5 + $0x10] sm:$0xff]
  %v1119 = vld [vmem:[%s5 + $0x18] sm:$0xff]
  %v1120 = vld [vmem:[%s6 + $0x2] sm:$0x1]
  %v1121 = vperm.slane %v1120, 0
  %v1123 = vsel %vm94, %v1114, 0
  %v1126 = vsel %vm94, %v1115, 0
  %1128 = vmatpush.msra.mxu0 0.0
  %1129 = vmatpush.msra.mxu0 0.0
  %1130 = vmatpush.msra.mxu0 0.0
  %1131 = vmatpush.msra.mxu0 0.0
  %1132 = vmatpush.msra.mxu0 0.0
  %1133 = vmatpush.msra.mxu0 0.0
  %1134 = vmatpush.msra.mxu0 0.0
  %1135 = vmatpush.msra.mxu0 0.0
  %1136 = vmatpush.msra.mxu0 0.0
  %1137 = vmatpush.msra.mxu0 0.0
  %1138 = vmatpush.msra.mxu0 0.0
  %1139 = vmatpush.msra.mxu0 0.0
  %1140 = vmatpush.msra.mxu0 %v1119
  %1141 = vmatpush.msra.mxu0 %v1118
  %1142 = vmatpush.msra.mxu0 %v1117
  %1143 = vmatpush.msra.mxu0 %v1116
  %1144 = vmatmul.f32.gmra.mxu0 %v1123
  %v1145 = vpop.f32.mrf.mxu0
  %v1146 = vadd.f32 %v1121, %v1145
  %1147 = vmatmul.f32.gmra.mxu0 %v1126
  %v1148 = vpop.f32.mrf.mxu0
  %v1149 = vadd.f32 %v1121, %v1148
  %1150 = vdwg.mxu0
  %v1151 = vtanh.pop %v1146
  %v1152 = vtanh.pop %v1149
  %v1153 = vld [vmem:[%s5 + $0x20] sm:$0xff]
  %v1154 = vld [vmem:[%s5 + $0x28] sm:$0xff]
  %v1155 = vld [vmem:[%s5 + $0x30] sm:$0xff]
  %v1156 = vld [vmem:[%s5 + $0x38] sm:$0xff]
  %v1157 = vld [vmem:[%s6 + $0x3] sm:$0x1]
  %v1158 = vperm.slane %v1157, 0
  %v1160 = vsel %vm94, %v1151, 0
  %v1163 = vsel %vm94, %v1152, 0
  %1165 = vmatpush.msra.mxu0 0.0
  %1166 = vmatpush.msra.mxu0 0.0
  %1167 = vmatpush.msra.mxu0 0.0
  %1168 = vmatpush.msra.mxu0 0.0
  %1169 = vmatpush.msra.mxu0 0.0
  %1170 = vmatpush.msra.mxu0 0.0
  %1171 = vmatpush.msra.mxu0 0.0
  %1172 = vmatpush.msra.mxu0 0.0
  %1173 = vmatpush.msra.mxu0 0.0
  %1174 = vmatpush.msra.mxu0 0.0
  %1175 = vmatpush.msra.mxu0 0.0
  %1176 = vmatpush.msra.mxu0 0.0
  %1177 = vmatpush.msra.mxu0 %v1156
  %1178 = vmatpush.msra.mxu0 %v1155
  %1179 = vmatpush.msra.mxu0 %v1154
  %1180 = vmatpush.msra.mxu0 %v1153
  %1181 = vmatmul.f32.gmra.mxu0 %v1160
  %v1182 = vpop.f32.mrf.mxu0
  %v1183 = vadd.f32 %v1158, %v1182
  %1184 = vmatmul.f32.gmra.mxu0 %v1163
  %v1185 = vpop.f32.mrf.mxu0
  %v1186 = vadd.f32 %v1158, %v1185
  %1187 = vdwg.mxu0
  %1188 = vst [vmem:[%s7] sm:$0xff] %v1183
  %1189 = vst [vmem:[%s7 + $0x8] sm:$0xff] %v1186
  // Predicated region
  $region30: #{bert_classifier_forward.1} parent=0 // pred_check
    _
  $region31: #{bert_classifier_forward.1} parent=0 // pred_check_branch
    %1191 = sbr.rel (0) target = $region33
  $region32: #{bert_classifier_forward.1} parent=0 // pred_region
    _
  $region33: #{bert_classifier_forward.1} parent=0 // pred_fallthru
    _
  // Predicated region
  $region34: #{bert_classifier_forward.1} parent=0 // pred_check
    _
  $region35: #{bert_classifier_forward.1} parent=0 // pred_check_branch
    %1193 = sbr.rel (0) target = $region37
  $region36: #{bert_classifier_forward.1} parent=0 // pred_region
    _
  $region37: #{bert_classifier_forward.1} parent=0 // pred_fallthru
    _

</llo_original>
